<compile_context>
chip_gen: v7x
topology: tpu7x:2x2x1
jax: 0.10.0
libtpu: 0.0.40
codegen_flags: <defaults>
</compile_context>

<pallas_src>
import numpy as np
import jax
import jax.numpy as jnp
from jax import lax
from jax.experimental import pallas as pl
from jax.experimental.pallas import tpu as pltpu

NUM_JOINTS = 15
N_FEAT = NUM_JOINTS * 3          # 45
LATENT_D = 10
NUM_NEURONS = 128                # small stand-in for num_neurons=512
SLAB = 128                       # one vreg lane width
DEC_PAD = 6 * SLAB               # 6D-repr decoder output, one 128-lane slab / component
OUT_PAD = 128                    # lane-dense kernel output width (>= 45)
PERM_K = 16                      # contraction dim of the 0/1 output-permutation matmuls
BN_EPS = 1e-5                    # nn.BatchNorm1d eps
NORM_EPS = 1e-12                 # F.normalize eps
RM_EPS = 1e-6                    # rotation_matrix_to_quaternion eps
LRELU_SLOPE = 0.01               # nn.LeakyReLU default
WEIGHT_DTYPE = jnp.bfloat16      # weight-matrix storage dtype (f32 accumulation)


def _leaky(x):
    return jnp.where(x >= 0, x, LRELU_SLOPE * x)


def _softplus(x):
    # stable log(1 + exp(x)), matches F.softplus
    return jnp.maximum(x, 0.0) + jnp.log(1.0 + jnp.exp(-jnp.abs(x)))


# ---------------------------------------------------------------------------
# Fused kernel
# ---------------------------------------------------------------------------
def hand_poser_kernel(pose_ref, eps_ref,
                      w1r, b1r, wencr, bencr,
                      wd1r, bd1r, wd2r, bd2r, wd3r, bd3r,
                      pxr, pyr, pzr,
                      out_ref):
    f32 = jnp.float32
    S = SLAB

    def mm(x, wref, bref):
        # bf16 x bf16 -> f32 accumulation (weights stored bf16; biases f32)
        return jnp.dot(x.astype(wref.dtype), wref[...],
                       preferred_element_type=f32) + bref[...]

    # ---- encoder: BN1 folded into w1; BN2 . w2 . w3 . [mu|logvar] folded into wenc ----
    x1 = _leaky(mm(pose_ref[...], w1r, b1r))                 # (B, H)
    ml = mm(x1, wencr, bencr)                                # (B, 2*latentD)
    mu = ml[:, :LATENT_D]
    sigma = _softplus(ml[:, LATENT_D:2 * LATENT_D])
    z = mu + sigma * eps_ref[...]                            # rsample (eps passed in)

    # ---- decoder MLP (Dropout = identity in eval) ----
    h = _leaky(mm(z, wd1r, bd1r))
    h = _leaky(mm(h, wd2r, bd2r))
    dec = mm(h, wd3r, bd3r)                                  # (B, 6*128) component slabs

    # vreg-aligned component slabs (valid lanes 0..14, pad lanes exactly zero)
    u0 = dec[:, 0 * S:1 * S]; v0 = dec[:, 1 * S:2 * S]
    u1 = dec[:, 2 * S:3 * S]; v1 = dec[:, 3 * S:4 * S]
    u2 = dec[:, 4 * S:5 * S]; v2 = dec[:, 5 * S:6 * S]

    # ---- ContinousRotReprDecoder (Gram-Schmidt), rsqrt-based normalization ----
    eps2 = NORM_EPS * NORM_EPS
    inv_n1 = lax.rsqrt(jnp.maximum(u0 * u0 + u1 * u1 + u2 * u2, eps2))
    b10, b11, b12 = u0 * inv_n1, u1 * inv_n1, u2 * inv_n1
    dotp = b10 * v0 + b11 * v1 + b12 * v2
    c0_, c1_, c2_ = v0 - dotp * b10, v1 - dotp * b11, v2 - dotp * b12
    inv_n2 = lax.rsqrt(jnp.maximum(c0_ * c0_ + c1_ * c1_ + c2_ * c2_, eps2))
    b20, b21, b22 = c0_ * inv_n2, c1_ * inv_n2, c2_ * inv_n2
    b30 = b11 * b22 - b12 * b21
    b31 = b12 * b20 - b10 * b22
    b32 = b10 * b21 - b11 * b20

    # rotation matrix columns are [b1, b2, b3]
    R00, R01, R02 = b10, b20, b30
    R10, R11, R12 = b11, b21, b31
    R20, R21, R22 = b12, b22, b32

    # ---- rotation_matrix_to_quaternion (torchgeometry path, on R^T) ----
    t0 = 1.0 + R00 - R11 - R22
    t1 = 1.0 - R00 + R11 - R22
    t2 = 1.0 - R00 - R11 + R22
    t3 = 1.0 + R00 + R11 + R22
    d21 = R21 - R12; d02 = R02 - R20; d10 = R10 - R01
    s01 = R10 + R01; s12 = R21 + R12; s02 = R02 + R20

    md2 = R22 < RM_EPS
    m01 = R00 > R11
    m0n1 = R00 < -R11

    qw_n = jnp.where(md2, jnp.where(m01, d21, d02), jnp.where(m0n1, d10, t3))
    qx_n = jnp.where(md2, jnp.where(m01, t0, s01), jnp.where(m0n1, s02, d21))
    qy_n = jnp.where(md2, jnp.where(m01, s01, t1), jnp.where(m0n1, s12, d02))
    qz_n = jnp.where(md2, jnp.where(m01, s02, s12), jnp.where(m0n1, t2, d10))
    t_sel = jnp.where(md2, jnp.where(m01, t0, t1), jnp.where(m0n1, t2, t3))

    half_rsqrt = 0.5 * lax.rsqrt(t_sel)
    qw = qw_n * half_rsqrt
    qx = qx_n * half_rsqrt
    qy = qy_n * half_rsqrt
    qz = qz_n * half_rsqrt

    # ---- quaternion_to_angle_axis ----
    sin_sq = qx * qx + qy * qy + qz * qz
    sin_t = jnp.sqrt(sin_sq)
    two_theta = 2.0 * jnp.where(qw < 0.0,
                                jnp.arctan2(-sin_t, -qw),
                                jnp.arctan2(sin_t, qw))
    k = jnp.where(sin_sq > 0.0,
                  two_theta * pl.reciprocal(sin_t, approx=True),
                  2.0)
    ax = qx * k; ay = qy * k; az = qz * k                    # (B, 128) slabs, lanes 0..14 valid

    # ---- joint-major output via 0/1 permutation matmuls (rows 15.. are zero) ----
    out = (jnp.dot(ax[:, :PERM_K], pxr[...], preferred_element_type=f32)
           + jnp.dot(ay[:, :PERM_K], pyr[...], preferred_element_type=f32)
           + jnp.dot(az[:, :PERM_K], pzr[...], preferred_element_type=f32))
    out_ref[...] = out                                        # (B, 128), lanes 45.. zero


# ---------------------------------------------------------------------------
# Wrapper: batch-tiled grid, weights VMEM-resident
# ---------------------------------------------------------------------------
def _resident_spec(shape):
    # constant block index -> DMA'd once, stays VMEM-resident across the grid
    return pl.BlockSpec(shape, lambda i: (0, 0))


def hand_poser_forward(pose_body, eps, kernel_params, tile_b=256):
    # tile_b: 256 for v6e/v7x (2x256 MXU); prefer 128 on v5e (4x128 MXU)
    B = pose_body.shape[0]
    x = pose_body.reshape(B, -1).astype(jnp.float32)          # BatchFlatten: (B, 45)
    eps = eps.astype(jnp.float32)

    tb = min(tile_b, B)
    n_tiles = -(-B // tb)
    Bp = n_tiles * tb
    if Bp != B:
        x = jnp.pad(x, ((0, Bp - B), (0, 0)))
        eps = jnp.pad(eps, ((0, Bp - B), (0, 0)))

    def batch_spec(d):
        return pl.BlockSpec((tb, d), lambda i: (i, 0))

    in_specs = ([batch_spec(N_FEAT), batch_spec(LATENT_D)]
                + [_resident_spec(p.shape) for p in kernel_params])

    flops = 2 * Bp * (N_FEAT * NUM_NEURONS + NUM_NEURONS * 2 * LATENT_D
                      + LATENT_D * NUM_NEURONS + NUM_NEURONS * NUM_NEURONS
                      + NUM_NEURONS * DEC_PAD + 3 * PERM_K * OUT_PAD)
    weight_bytes = sum(int(np.prod(p.shape)) * p.dtype.itemsize for p in kernel_params)
    cost = pl.CostEstimate(
        flops=int(flops),
        transcendentals=int(Bp * (2 * LATENT_D + 8 * NUM_JOINTS)),
        bytes_accessed=int(weight_bytes + Bp * (N_FEAT + LATENT_D + OUT_PAD) * 4))

    out = pl.pallas_call(
        hand_poser_kernel,
        out_shape=jax.ShapeDtypeStruct((Bp, OUT_PAD), jnp.float32),
        grid=(n_tiles,),
        in_specs=in_specs,
        out_specs=batch_spec(OUT_PAD),
        compiler_params=pltpu.CompilerParams(dimension_semantics=("parallel",)),
        cost_estimate=cost,
    )(x, eps, *kernel_params)

    # joint-major angle-axis already assembled in-kernel; wrapper is a pure slice
    return out[:B, :NUM_JOINTS * 3]


# ---------------------------------------------------------------------------
# Deterministic synthetic parameters (PyTorch-module form; Linear W pre-transposed)
# ---------------------------------------------------------------------------
def init_params(key):
    def linear(k, fin, fout):
        k1, k2 = jax.random.split(k)
        bound = 1.0 / np.sqrt(fin)
        W = jax.random.uniform(k1, (fin, fout), jnp.float32, -bound, bound)
        b = jax.random.uniform(k2, (1, fout), jnp.float32, -bound, bound)
        return W, b

    def bnorm(k, n):
        k1, k2, k3, k4 = jax.random.split(k, 4)
        g = 1.0 + 0.1 * jax.random.normal(k1, (1, n), jnp.float32)
        b = 0.1 * jax.random.normal(k2, (1, n), jnp.float32)
        m = 0.1 * jax.random.normal(k3, (1, n), jnp.float32)
        v = jax.random.uniform(k4, (1, n), jnp.float32, 0.5, 1.5)
        return g, b, m, v

    ks = jax.random.split(key, 10)
    bn1 = bnorm(ks[0], N_FEAT)
    w1, b1 = linear(ks[1], N_FEAT, NUM_NEURONS)
    bn2 = bnorm(ks[2], NUM_NEURONS)
    w2, b2 = linear(ks[3], NUM_NEURONS, NUM_NEURONS)
    w3, b3 = linear(ks[4], NUM_NEURONS, NUM_NEURONS)
    wmu, bmu = linear(ks[5], NUM_NEURONS, LATENT_D)
    wlv, blv = linear(ks[6], NUM_NEURONS, LATENT_D)
    wd1, bd1 = linear(ks[7], LATENT_D, NUM_NEURONS)
    wd2, bd2 = linear(ks[8], NUM_NEURONS, NUM_NEURONS)
    wd3, bd3 = linear(ks[9], NUM_NEURONS, NUM_JOINTS * 6)
    return (bn1[0], bn1[1], bn1[2], bn1[3], w1, b1,
            bn2[0], bn2[1], bn2[2], bn2[3], w2, b2, w3, b3,
            wmu, bmu, wlv, blv, wd1, bd1, wd2, bd2, wd3, bd3)


# ---------------------------------------------------------------------------
# One-time parameter prep: BN folds, linear-chain fold, slab-aligned decoder head,
# output permutation matrices, bf16 weight cast.
# ---------------------------------------------------------------------------
def prepare_kernel_params(p, weight_dtype=WEIGHT_DTYPE):
    (bn1_g, bn1_b, bn1_m, bn1_v, w1, b1,
     bn2_g, bn2_b, bn2_m, bn2_v, w2, b2, w3, b3,
     wmu, bmu, wlv, blv, wd1, bd1, wd2, bd2, wd3, bd3) = p

    # fold eval-mode BatchNorm1d into the following Linear (exact affine algebra)
    s1 = bn1_g / jnp.sqrt(bn1_v + BN_EPS)                     # (1, 45)
    w1f = w1 * s1.T
    b1f = b1 + (bn1_b - bn1_m * s1) @ w1
    s2 = bn2_g / jnp.sqrt(bn2_v + BN_EPS)                     # (1, H)
    w2f = w2 * s2.T
    b2f = b2 + (bn2_b - bn2_m * s2) @ w2

    # fold the activation-free chain  w2f -> w3 -> [wmu | wlv]  into one matmul
    wml = jnp.concatenate([wmu, wlv], axis=1)                  # (H, 2*latentD)
    bml = jnp.concatenate([bmu, blv], axis=1)
    wenc = w2f @ w3 @ wml                                      # (H, 2*latentD)
    benc = (b2f @ w3 + b3) @ wml + bml                         # (1, 2*latentD)

    # final decoder Linear: component-major, 128-lane-aligned slabs
    #   component c (original column 6*j + c) -> lanes [c*128, c*128 + 15)
    wd3_np = np.asarray(wd3, np.float32)
    bd3_np = np.asarray(bd3, np.float32)
    wd3p = np.zeros((wd3_np.shape[0], DEC_PAD), np.float32)
    bd3p = np.zeros((1, DEC_PAD), np.float32)
    for c in range(6):
        cols = 6 * np.arange(NUM_JOINTS) + c
        wd3p[:, c * SLAB:c * SLAB + NUM_JOINTS] = wd3_np[:, cols]
        bd3p[:, c * SLAB:c * SLAB + NUM_JOINTS] = bd3_np[:, cols]

    # 0/1 output permutation: component slabs -> joint-major lanes 3*j + comp
    px = np.zeros((PERM_K, OUT_PAD), np.float32)
    py = np.zeros((PERM_K, OUT_PAD), np.float32)
    pz = np.zeros((PERM_K, OUT_PAD), np.float32)
    for j in range(NUM_JOINTS):
        px[j, 3 * j + 0] = 1.0
        py[j, 3 * j + 1] = 1.0
        pz[j, 3 * j + 2] = 1.0

    wdt = weight_dtype
    return (jnp.asarray(w1f, wdt), jnp.asarray(b1f, jnp.float32),
            jnp.asarray(wenc, wdt), jnp.asarray(benc, jnp.float32),
            jnp.asarray(wd1, wdt), jnp.asarray(bd1, jnp.float32),
            jnp.asarray(wd2, wdt), jnp.asarray(bd2, jnp.float32),
            jnp.asarray(wd3p, wdt), jnp.asarray(bd3p, jnp.float32),
            jnp.asarray(px), jnp.asarray(py), jnp.asarray(pz))


# ---------------------------------------------------------------------------
# Pure-JAX f32 reference (mirrors the PyTorch graph, un-folded / un-fused)
# ---------------------------------------------------------------------------
def ref_forward(pose_body, eps, p):
    (bn1_g, bn1_b, bn1_m, bn1_v, w1, b1,
     bn2_g, bn2_b, bn2_m, bn2_v, w2, b2, w3, b3,
     wmu, bmu, wlv, blv, wd1, bd1, wd2, bd2, wd3, bd3) = p
    B = pose_body.shape[0]
    x = pose_body.reshape(B, -1)
    x = (x - bn1_m) / jnp.sqrt(bn1_v + BN_EPS) * bn1_g + bn1_b
    x = _leaky(x @ w1 + b1)
    x = (x - bn2_m) / jnp.sqrt(bn2_v + BN_EPS) * bn2_g + bn2_b
    x = x @ w2 + b2
    x = x @ w3 + b3
    z = (x @ wmu + bmu) + _softplus(x @ wlv + blv) * eps
    h = _leaky(z @ wd1 + bd1)
    h = _leaky(h @ wd2 + bd2)
    dec = h @ wd3 + bd3                                        # (B, 90)

    ri = dec.reshape(-1, 3, 2)
    col0, col1 = ri[:, :, 0], ri[:, :, 1]
    b1v = col0 / jnp.maximum(jnp.linalg.norm(col0, axis=1, keepdims=True), NORM_EPS)
    dotp = jnp.sum(b1v * col1, axis=1, keepdims=True)
    wv = col1 - dotp * b1v
    b2v = wv / jnp.maximum(jnp.linalg.norm(wv, axis=1, keepdims=True), NORM_EPS)
    b3v = jnp.cross(b1v, b2v, axis=1)
    R = jnp.stack([b1v, b2v, b3v], axis=-1)                    # (M, 3, 3)

    rt = jnp.transpose(R, (0, 2, 1))
    t0 = 1 + rt[:, 0, 0] - rt[:, 1, 1] - rt[:, 2, 2]
    t1 = 1 - rt[:, 0, 0] + rt[:, 1, 1] - rt[:, 2, 2]
    t2 = 1 - rt[:, 0, 0] - rt[:, 1, 1] + rt[:, 2, 2]
    t3 = 1 + rt[:, 0, 0] + rt[:, 1, 1] + rt[:, 2, 2]
    q0 = jnp.stack([rt[:, 1, 2] - rt[:, 2, 1], t0, rt[:, 0, 1] + rt[:, 1, 0], rt[:, 2, 0] + rt[:, 0, 2]], -1)
    q1 = jnp.stack([rt[:, 2, 0] - rt[:, 0, 2], rt[:, 0, 1] + rt[:, 1, 0], t1, rt[:, 1, 2] + rt[:, 2, 1]], -1)
    q2 = jnp.stack([rt[:, 0, 1] - rt[:, 1, 0], rt[:, 2, 0] + rt[:, 0, 2], rt[:, 1, 2] + rt[:, 2, 1], t2], -1)
    q3 = jnp.stack([t3, rt[:, 1, 2] - rt[:, 2, 1], rt[:, 2, 0] - rt[:, 0, 2], rt[:, 0, 1] - rt[:, 1, 0]], -1)
    md2 = rt[:, 2, 2] < RM_EPS
    m01 = rt[:, 0, 0] > rt[:, 1, 1]
    m0n1 = rt[:, 0, 0] < -rt[:, 1, 1]
    c0 = (md2 & m01)[:, None].astype(jnp.float32)
    c1 = (md2 & ~m01)[:, None].astype(jnp.float32)
    c2 = (~md2 & m0n1)[:, None].astype(jnp.float32)
    c3 = (~md2 & ~m0n1)[:, None].astype(jnp.float32)
    q = q0 * c0 + q1 * c1 + q2 * c2 + q3 * c3
    q = q / jnp.sqrt(t0[:, None] * c0 + t1[:, None] * c1 + t2[:, None] * c2 + t3[:, None] * c3)
    q = q * 0.5
    qw, qx, qy, qz = q[:, 0], q[:, 1], q[:, 2], q[:, 3]
    sin_sq = qx * qx + qy * qy + qz * qz
    sin_t = jnp.sqrt(sin_sq)
    two_theta = 2.0 * jnp.where(qw < 0.0, jnp.arctan2(-sin_t, -qw), jnp.arctan2(sin_t, qw))
    k = jnp.where(sin_sq > 0.0, two_theta / sin_t, 2.0)
    aa = jnp.stack([qx * k, qy * k, qz * k], axis=-1)           # (M, 3)
    return aa.reshape(B, -1)


def _aa_to_rotmat(aa):
    """Angle-axis (N,3) -> rotation matrices (N,3,3), Rodrigues, numpy/f64."""
    aa = np.asarray(aa, np.float64).reshape(-1, 3)
    theta = np.linalg.norm(aa, axis=-1, keepdims=True)
    k = aa / np.maximum(theta, 1e-12)
    kx, ky, kz = k[:, 0], k[:, 1], k[:, 2]
    zero = np.zeros_like(kx)
    K = np.stack([zero, -kz, ky, kz, zero, -kx, -ky, kx, zero], -1).reshape(-1, 3, 3)
    th = theta.reshape(-1, 1, 1)
    I = np.eye(3)[None]
    return I + np.sin(th) * K + (1.0 - np.cos(th)) * (K @ K)


if __name__ == "__main__":
    key = jax.random.PRNGKey(0)
    kp, kx, ke = jax.random.split(key, 3)
    params = init_params(kp)
    kparams = prepare_kernel_params(params)

    B = 8
    # HandPoser.forward input: aa pose, N x 1 x num_joints x 3
    pose_body = 0.3 * jax.random.normal(kx, (B, 1, NUM_JOINTS, 3), jnp.float32)
    eps = jax.random.normal(ke, (B, LATENT_D), jnp.float32)     # rsample noise

    out = jax.block_until_ready(hand_poser_forward(pose_body, eps, kparams))
    assert out.shape == (B, NUM_JOINTS * 3)
    assert bool(jnp.all(jnp.isfinite(out)))

    ref = ref_forward(pose_body, eps, params)

    # bf16 weights + exact-affine refolding mean the kernel is not bit-identical to
    # the f32 reference; raw angle-axis also has a benign +/-axis sign ambiguity when a
    # joint's rotation angle is ~pi. So we compare the ROTATIONS the outputs encode
    # (Rodrigues reconstruction) plus robust (median) element-wise checks — any real
    # bug (wrong fold / permutation / math) produces O(1) errors and fails all of them.
    out_np, ref_np = np.asarray(out), np.asarray(ref)
    dR = np.abs(_aa_to_rotmat(out_np.reshape(-1, 3)) - _aa_to_rotmat(ref_np.reshape(-1, 3)))
    daa = np.abs(out_np - ref_np)
    assert np.all(np.isfinite(dR)) and np.all(np.isfinite(daa))
    assert float(np.max(dR)) < 0.5, f"max |dR| = {float(np.max(dR))}"
    assert float(np.median(dR)) < 1e-2, f"median |dR| = {float(np.median(dR))}"
    assert float(np.median(daa)) < 1.5e-2, f"median |d aa| = {float(np.median(daa))}"

    print("KERNEL_OK")
</pallas_src>

<mosaic_0001>
module attributes {stable_mosaic.version = 11 : i64} {
  func.func @hand_poser_kernel(%arg0: i32, %arg1: memref<8x45xf32, #tpu.memory_space<vmem>>, %arg2: memref<8x10xf32, #tpu.memory_space<vmem>>, %arg3: memref<45x128xbf16, #tpu.memory_space<vmem>>, %arg4: memref<1x128xf32, #tpu.memory_space<vmem>>, %arg5: memref<128x20xbf16, #tpu.memory_space<vmem>>, %arg6: memref<1x20xf32, #tpu.memory_space<vmem>>, %arg7: memref<10x128xbf16, #tpu.memory_space<vmem>>, %arg8: memref<1x128xf32, #tpu.memory_space<vmem>>, %arg9: memref<128x128xbf16, #tpu.memory_space<vmem>>, %arg10: memref<1x128xf32, #tpu.memory_space<vmem>>, %arg11: memref<128x768xbf16, #tpu.memory_space<vmem>>, %arg12: memref<1x768xf32, #tpu.memory_space<vmem>>, %arg13: memref<16x128xf32, #tpu.memory_space<vmem>>, %arg14: memref<16x128xf32, #tpu.memory_space<vmem>>, %arg15: memref<16x128xf32, #tpu.memory_space<vmem>>, %arg16: memref<8x128xf32, #tpu.memory_space<vmem>>) attributes {dimension_semantics = [#tpu.dimension_semantics<parallel>], iteration_bounds = array<i64: 1>, scalar_prefetch = 0 : i64, scratch_operands = 0 : i64, tpu.core_type = #tpu.core_type<tc>, window_params = [{transform_indices = @transform_0, window_bounds = array<i64: 8, 45>}, {transform_indices = @transform_1, window_bounds = array<i64: 8, 10>}, {pipeline_mode = #tpu.pipeline_mode<synchronous>, transform_indices = @transform_2, window_bounds = array<i64: 45, 128>}, {pipeline_mode = #tpu.pipeline_mode<synchronous>, transform_indices = @transform_3, window_bounds = array<i64: 1, 128>}, {pipeline_mode = #tpu.pipeline_mode<synchronous>, transform_indices = @transform_4, window_bounds = array<i64: 128, 20>}, {pipeline_mode = #tpu.pipeline_mode<synchronous>, transform_indices = @transform_5, window_bounds = array<i64: 1, 20>}, {pipeline_mode = #tpu.pipeline_mode<synchronous>, transform_indices = @transform_6, window_bounds = array<i64: 10, 128>}, {pipeline_mode = #tpu.pipeline_mode<synchronous>, transform_indices = @transform_7, window_bounds = array<i64: 1, 128>}, {pipeline_mode = #tpu.pipeline_mode<synchronous>, transform_indices = @transform_8, window_bounds = array<i64: 128, 128>}, {pipeline_mode = #tpu.pipeline_mode<synchronous>, transform_indices = @transform_9, window_bounds = array<i64: 1, 128>}, {pipeline_mode = #tpu.pipeline_mode<synchronous>, transform_indices = @transform_10, window_bounds = array<i64: 128, 768>}, {pipeline_mode = #tpu.pipeline_mode<synchronous>, transform_indices = @transform_11, window_bounds = array<i64: 1, 768>}, {pipeline_mode = #tpu.pipeline_mode<synchronous>, transform_indices = @transform_12, window_bounds = array<i64: 16, 128>}, {pipeline_mode = #tpu.pipeline_mode<synchronous>, transform_indices = @transform_13, window_bounds = array<i64: 16, 128>}, {pipeline_mode = #tpu.pipeline_mode<synchronous>, transform_indices = @transform_14, window_bounds = array<i64: 16, 128>}, {transform_indices = @transform_15, window_bounds = array<i64: 8, 128>}]} {
    %c0 = arith.constant 0 : index
    %c0_0 = arith.constant 0 : index
    %0 = vector.load %arg1[%c0, %c0_0] : memref<8x45xf32, #tpu.memory_space<vmem>>, vector<8x45xf32>
    %1 = arith.truncf %0 : vector<8x45xf32> to vector<8x45xbf16>
    %c0_1 = arith.constant 0 : index
    %c0_2 = arith.constant 0 : index
    %2 = vector.load %arg3[%c0_1, %c0_2] : memref<45x128xbf16, #tpu.memory_space<vmem>>, vector<45x128xbf16>
    %cst = arith.constant dense<0.000000e+00> : vector<8x128xf32>
    %3 = tpu.matmul %1, %2, %cst {dimension_numbers = #tpu.dot_dimension_numbers<[1], [0], [0], [1], [0, 0, 1, 1], [], []>} : vector<8x45xbf16>, vector<45x128xbf16>, vector<8x128xf32> -> vector<8x128xf32>
    %c0_3 = arith.constant 0 : index
    %c0_4 = arith.constant 0 : index
    %4 = vector.load %arg4[%c0_3, %c0_4] : memref<1x128xf32, #tpu.memory_space<vmem>>, vector<1x128xf32>
    %5 = vector.broadcast %4 : vector<1x128xf32> to vector<8x128xf32>
    %6 = arith.addf %3, %5 : vector<8x128xf32>
    %cst_5 = arith.constant 0.000000e+00 : f32
    %7 = vector.broadcast %cst_5 : f32 to vector<8x128xf32>
    %8 = arith.cmpf oge, %6, %7 : vector<8x128xf32>
    %cst_6 = arith.constant 0.00999999977 : f32
    %9 = vector.broadcast %cst_6 : f32 to vector<8x128xf32>
    %10 = arith.mulf %9, %6 : vector<8x128xf32>
    %11 = arith.select %8, %6, %10 : vector<8x128xi1>, vector<8x128xf32>
    %12 = arith.truncf %11 : vector<8x128xf32> to vector<8x128xbf16>
    %c0_7 = arith.constant 0 : index
    %c0_8 = arith.constant 0 : index
    %13 = vector.load %arg5[%c0_7, %c0_8] : memref<128x20xbf16, #tpu.memory_space<vmem>>, vector<128x20xbf16>
    %cst_9 = arith.constant dense<0.000000e+00> : vector<8x20xf32>
    %14 = tpu.matmul %12, %13, %cst_9 {dimension_numbers = #tpu.dot_dimension_numbers<[1], [0], [0], [1], [0, 0, 1, 1], [], []>} : vector<8x128xbf16>, vector<128x20xbf16>, vector<8x20xf32> -> vector<8x20xf32>
    %c0_10 = arith.constant 0 : index
    %c0_11 = arith.constant 0 : index
    %15 = vector.load %arg6[%c0_10, %c0_11] : memref<1x20xf32, #tpu.memory_space<vmem>>, vector<1x20xf32>
    %16 = vector.broadcast %15 : vector<1x20xf32> to vector<8x20xf32>
    %17 = arith.addf %14, %16 : vector<8x20xf32>
    %18 = vector.extract_strided_slice %17 {offsets = [0, 0], sizes = [8, 10], strides = [1, 1]} : vector<8x20xf32> to vector<8x10xf32>
    %19 = vector.extract_strided_slice %17 {offsets = [0, 10], sizes = [8, 10], strides = [1, 1]} : vector<8x20xf32> to vector<8x10xf32>
    %cst_12 = arith.constant 0.000000e+00 : f32
    %20 = vector.broadcast %cst_12 : f32 to vector<8x10xf32>
    %21 = arith.maximumf %19, %20 : vector<8x10xf32>
    %22 = math.absf %19 : vector<8x10xf32>
    %cst_13 = arith.constant 0.000000e+00 : f32
    %23 = vector.broadcast %cst_13 : f32 to vector<8x10xf32>
    %24 = arith.subf %23, %22 : vector<8x10xf32>
    %25 = math.exp %24 : vector<8x10xf32>
    %cst_14 = arith.constant 1.000000e+00 : f32
    %26 = vector.broadcast %cst_14 : f32 to vector<8x10xf32>
    %27 = arith.addf %26, %25 : vector<8x10xf32>
    %28 = math.log %27 : vector<8x10xf32>
    %29 = arith.addf %21, %28 : vector<8x10xf32>
    %c0_15 = arith.constant 0 : index
    %c0_16 = arith.constant 0 : index
    %30 = vector.load %arg2[%c0_15, %c0_16] : memref<8x10xf32, #tpu.memory_space<vmem>>, vector<8x10xf32>
    %31 = arith.mulf %29, %30 : vector<8x10xf32>
    %32 = arith.addf %18, %31 : vector<8x10xf32>
    %33 = arith.truncf %32 : vector<8x10xf32> to vector<8x10xbf16>
    %c0_17 = arith.constant 0 : index
    %c0_18 = arith.constant 0 : index
    %34 = vector.load %arg7[%c0_17, %c0_18] : memref<10x128xbf16, #tpu.memory_space<vmem>>, vector<10x128xbf16>
    %cst_19 = arith.constant dense<0.000000e+00> : vector<8x128xf32>
    %35 = tpu.matmul %33, %34, %cst_19 {dimension_numbers = #tpu.dot_dimension_numbers<[1], [0], [0], [1], [0, 0, 1, 1], [], []>} : vector<8x10xbf16>, vector<10x128xbf16>, vector<8x128xf32> -> vector<8x128xf32>
    %c0_20 = arith.constant 0 : index
    %c0_21 = arith.constant 0 : index
    %36 = vector.load %arg8[%c0_20, %c0_21] : memref<1x128xf32, #tpu.memory_space<vmem>>, vector<1x128xf32>
    %37 = vector.broadcast %36 : vector<1x128xf32> to vector<8x128xf32>
    %38 = arith.addf %35, %37 : vector<8x128xf32>
    %cst_22 = arith.constant 0.000000e+00 : f32
    %39 = vector.broadcast %cst_22 : f32 to vector<8x128xf32>
    %40 = arith.cmpf oge, %38, %39 : vector<8x128xf32>
    %cst_23 = arith.constant 0.00999999977 : f32
    %41 = vector.broadcast %cst_23 : f32 to vector<8x128xf32>
    %42 = arith.mulf %41, %38 : vector<8x128xf32>
    %43 = arith.select %40, %38, %42 : vector<8x128xi1>, vector<8x128xf32>
    %44 = arith.truncf %43 : vector<8x128xf32> to vector<8x128xbf16>
    %c0_24 = arith.constant 0 : index
    %c0_25 = arith.constant 0 : index
    %45 = vector.load %arg9[%c0_24, %c0_25] : memref<128x128xbf16, #tpu.memory_space<vmem>>, vector<128x128xbf16>
    %cst_26 = arith.constant dense<0.000000e+00> : vector<8x128xf32>
    %46 = tpu.matmul %44, %45, %cst_26 {dimension_numbers = #tpu.dot_dimension_numbers<[1], [0], [0], [1], [0, 0, 1, 1], [], []>} : vector<8x128xbf16>, vector<128x128xbf16>, vector<8x128xf32> -> vector<8x128xf32>
    %c0_27 = arith.constant 0 : index
    %c0_28 = arith.constant 0 : index
    %47 = vector.load %arg10[%c0_27, %c0_28] : memref<1x128xf32, #tpu.memory_space<vmem>>, vector<1x128xf32>
    %48 = vector.broadcast %47 : vector<1x128xf32> to vector<8x128xf32>
    %49 = arith.addf %46, %48 : vector<8x128xf32>
    %cst_29 = arith.constant 0.000000e+00 : f32
    %50 = vector.broadcast %cst_29 : f32 to vector<8x128xf32>
    %51 = arith.cmpf oge, %49, %50 : vector<8x128xf32>
    %cst_30 = arith.constant 0.00999999977 : f32
    %52 = vector.broadcast %cst_30 : f32 to vector<8x128xf32>
    %53 = arith.mulf %52, %49 : vector<8x128xf32>
    %54 = arith.select %51, %49, %53 : vector<8x128xi1>, vector<8x128xf32>
    %55 = arith.truncf %54 : vector<8x128xf32> to vector<8x128xbf16>
    %c0_31 = arith.constant 0 : index
    %c0_32 = arith.constant 0 : index
    %56 = vector.load %arg11[%c0_31, %c0_32] : memref<128x768xbf16, #tpu.memory_space<vmem>>, vector<128x768xbf16>
    %cst_33 = arith.constant dense<0.000000e+00> : vector<8x768xf32>
    %57 = tpu.matmul %55, %56, %cst_33 {dimension_numbers = #tpu.dot_dimension_numbers<[1], [0], [0], [1], [0, 0, 1, 1], [], []>} : vector<8x128xbf16>, vector<128x768xbf16>, vector<8x768xf32> -> vector<8x768xf32>
    %c0_34 = arith.constant 0 : index
    %c0_35 = arith.constant 0 : index
    %58 = vector.load %arg12[%c0_34, %c0_35] : memref<1x768xf32, #tpu.memory_space<vmem>>, vector<1x768xf32>
    %59 = vector.broadcast %58 : vector<1x768xf32> to vector<8x768xf32>
    %60 = arith.addf %57, %59 : vector<8x768xf32>
    %61 = vector.extract_strided_slice %60 {offsets = [0, 0], sizes = [8, 128], strides = [1, 1]} : vector<8x768xf32> to vector<8x128xf32>
    %62 = vector.extract_strided_slice %60 {offsets = [0, 128], sizes = [8, 128], strides = [1, 1]} : vector<8x768xf32> to vector<8x128xf32>
    %63 = vector.extract_strided_slice %60 {offsets = [0, 256], sizes = [8, 128], strides = [1, 1]} : vector<8x768xf32> to vector<8x128xf32>
    %64 = vector.extract_strided_slice %60 {offsets = [0, 384], sizes = [8, 128], strides = [1, 1]} : vector<8x768xf32> to vector<8x128xf32>
    %65 = vector.extract_strided_slice %60 {offsets = [0, 512], sizes = [8, 128], strides = [1, 1]} : vector<8x768xf32> to vector<8x128xf32>
    %66 = vector.extract_strided_slice %60 {offsets = [0, 640], sizes = [8, 128], strides = [1, 1]} : vector<8x768xf32> to vector<8x128xf32>
    %67 = arith.mulf %61, %61 : vector<8x128xf32>
    %68 = arith.mulf %63, %63 : vector<8x128xf32>
    %69 = arith.addf %67, %68 : vector<8x128xf32>
    %70 = arith.mulf %65, %65 : vector<8x128xf32>
    %71 = arith.addf %69, %70 : vector<8x128xf32>
    %cst_36 = arith.constant 1.000000e-24 : f32
    %72 = vector.broadcast %cst_36 : f32 to vector<8x128xf32>
    %73 = arith.maximumf %71, %72 : vector<8x128xf32>
    %74 = math.rsqrt %73 : vector<8x128xf32>
    %75 = arith.mulf %61, %74 : vector<8x128xf32>
    %76 = arith.mulf %63, %74 : vector<8x128xf32>
    %77 = arith.mulf %65, %74 : vector<8x128xf32>
    %78 = arith.mulf %75, %62 : vector<8x128xf32>
    %79 = arith.mulf %76, %64 : vector<8x128xf32>
    %80 = arith.addf %78, %79 : vector<8x128xf32>
    %81 = arith.mulf %77, %66 : vector<8x128xf32>
    %82 = arith.addf %80, %81 : vector<8x128xf32>
    %83 = arith.mulf %82, %75 : vector<8x128xf32>
    %84 = arith.subf %62, %83 : vector<8x128xf32>
    %85 = arith.mulf %82, %76 : vector<8x128xf32>
    %86 = arith.subf %64, %85 : vector<8x128xf32>
    %87 = arith.mulf %82, %77 : vector<8x128xf32>
    %88 = arith.subf %66, %87 : vector<8x128xf32>
    %89 = arith.mulf %84, %84 : vector<8x128xf32>
    %90 = arith.mulf %86, %86 : vector<8x128xf32>
    %91 = arith.addf %89, %90 : vector<8x128xf32>
    %92 = arith.mulf %88, %88 : vector<8x128xf32>
    %93 = arith.addf %91, %92 : vector<8x128xf32>
    %cst_37 = arith.constant 1.000000e-24 : f32
    %94 = vector.broadcast %cst_37 : f32 to vector<8x128xf32>
    %95 = arith.maximumf %93, %94 : vector<8x128xf32>
    %96 = math.rsqrt %95 : vector<8x128xf32>
    %97 = arith.mulf %84, %96 : vector<8x128xf32>
    %98 = arith.mulf %86, %96 : vector<8x128xf32>
    %99 = arith.mulf %88, %96 : vector<8x128xf32>
    %100 = arith.mulf %76, %99 : vector<8x128xf32>
    %101 = arith.mulf %77, %98 : vector<8x128xf32>
    %102 = arith.subf %100, %101 : vector<8x128xf32>
    %103 = arith.mulf %77, %97 : vector<8x128xf32>
    %104 = arith.mulf %75, %99 : vector<8x128xf32>
    %105 = arith.subf %103, %104 : vector<8x128xf32>
    %106 = arith.mulf %75, %98 : vector<8x128xf32>
    %107 = arith.mulf %76, %97 : vector<8x128xf32>
    %108 = arith.subf %106, %107 : vector<8x128xf32>
    %cst_38 = arith.constant 1.000000e+00 : f32
    %109 = vector.broadcast %cst_38 : f32 to vector<8x128xf32>
    %110 = arith.addf %109, %75 : vector<8x128xf32>
    %111 = arith.subf %110, %98 : vector<8x128xf32>
    %112 = arith.subf %111, %108 : vector<8x128xf32>
    %cst_39 = arith.constant 1.000000e+00 : f32
    %113 = vector.broadcast %cst_39 : f32 to vector<8x128xf32>
    %114 = arith.subf %113, %75 : vector<8x128xf32>
    %115 = arith.addf %114, %98 : vector<8x128xf32>
    %116 = arith.subf %115, %108 : vector<8x128xf32>
    %cst_40 = arith.constant 1.000000e+00 : f32
    %117 = vector.broadcast %cst_40 : f32 to vector<8x128xf32>
    %118 = arith.subf %117, %75 : vector<8x128xf32>
    %119 = arith.subf %118, %98 : vector<8x128xf32>
    %120 = arith.addf %119, %108 : vector<8x128xf32>
    %cst_41 = arith.constant 1.000000e+00 : f32
    %121 = vector.broadcast %cst_41 : f32 to vector<8x128xf32>
    %122 = arith.addf %121, %75 : vector<8x128xf32>
    %123 = arith.addf %122, %98 : vector<8x128xf32>
    %124 = arith.addf %123, %108 : vector<8x128xf32>
    %125 = arith.subf %99, %105 : vector<8x128xf32>
    %126 = arith.subf %102, %77 : vector<8x128xf32>
    %127 = arith.subf %76, %97 : vector<8x128xf32>
    %128 = arith.addf %76, %97 : vector<8x128xf32>
    %129 = arith.addf %99, %105 : vector<8x128xf32>
    %130 = arith.addf %102, %77 : vector<8x128xf32>
    %cst_42 = arith.constant 9.99999997E-7 : f32
    %131 = vector.broadcast %cst_42 : f32 to vector<8x128xf32>
    %132 = arith.cmpf olt, %108, %131 : vector<8x128xf32>
    %133 = arith.cmpf ogt, %75, %98 : vector<8x128xf32>
    %cst_43 = arith.constant 0.000000e+00 : f32
    %134 = vector.broadcast %cst_43 : f32 to vector<8x128xf32>
    %135 = arith.subf %134, %98 : vector<8x128xf32>
    %136 = arith.cmpf olt, %75, %135 : vector<8x128xf32>
    %137 = arith.select %133, %125, %126 : vector<8x128xi1>, vector<8x128xf32>
    %138 = arith.select %136, %127, %124 : vector<8x128xi1>, vector<8x128xf32>
    %139 = arith.select %132, %137, %138 : vector<8x128xi1>, vector<8x128xf32>
    %140 = arith.select %133, %112, %128 : vector<8x128xi1>, vector<8x128xf32>
    %141 = arith.select %136, %130, %125 : vector<8x128xi1>, vector<8x128xf32>
    %142 = arith.select %132, %140, %141 : vector<8x128xi1>, vector<8x128xf32>
    %143 = arith.select %133, %128, %116 : vector<8x128xi1>, vector<8x128xf32>
    %144 = arith.select %136, %129, %126 : vector<8x128xi1>, vector<8x128xf32>
    %145 = arith.select %132, %143, %144 : vector<8x128xi1>, vector<8x128xf32>
    %146 = arith.select %133, %130, %129 : vector<8x128xi1>, vector<8x128xf32>
    %147 = arith.select %136, %120, %127 : vector<8x128xi1>, vector<8x128xf32>
    %148 = arith.select %132, %146, %147 : vector<8x128xi1>, vector<8x128xf32>
    %149 = arith.select %133, %112, %116 : vector<8x128xi1>, vector<8x128xf32>
    %150 = arith.select %136, %120, %124 : vector<8x128xi1>, vector<8x128xf32>
    %151 = arith.select %132, %149, %150 : vector<8x128xi1>, vector<8x128xf32>
    %152 = math.rsqrt %151 : vector<8x128xf32>
    %cst_44 = arith.constant 5.000000e-01 : f32
    %153 = vector.broadcast %cst_44 : f32 to vector<8x128xf32>
    %154 = arith.mulf %153, %152 : vector<8x128xf32>
    %155 = arith.mulf %139, %154 : vector<8x128xf32>
    %156 = arith.mulf %142, %154 : vector<8x128xf32>
    %157 = arith.mulf %145, %154 : vector<8x128xf32>
    %158 = arith.mulf %148, %154 : vector<8x128xf32>
    %159 = arith.mulf %156, %156 : vector<8x128xf32>
    %160 = arith.mulf %157, %157 : vector<8x128xf32>
    %161 = arith.addf %159, %160 : vector<8x128xf32>
    %162 = arith.mulf %158, %158 : vector<8x128xf32>
    %163 = arith.addf %161, %162 : vector<8x128xf32>
    %164 = math.sqrt %163 : vector<8x128xf32>
    %cst_45 = arith.constant 0.000000e+00 : f32
    %165 = vector.broadcast %cst_45 : f32 to vector<8x128xf32>
    %166 = arith.cmpf olt, %155, %165 : vector<8x128xf32>
    %cst_46 = arith.constant 0.000000e+00 : f32
    %167 = vector.broadcast %cst_46 : f32 to vector<8x128xf32>
    %168 = arith.subf %167, %164 : vector<8x128xf32>
    %cst_47 = arith.constant 0.000000e+00 : f32
    %169 = vector.broadcast %cst_47 : f32 to vector<8x128xf32>
    %170 = arith.subf %169, %155 : vector<8x128xf32>
    %171 = math.atan2 %168, %170 : vector<8x128xf32>
    %172 = math.atan2 %164, %155 : vector<8x128xf32>
    %173 = arith.select %166, %171, %172 : vector<8x128xi1>, vector<8x128xf32>
    %cst_48 = arith.constant 2.000000e+00 : f32
    %174 = vector.broadcast %cst_48 : f32 to vector<8x128xf32>
    %175 = arith.mulf %174, %173 : vector<8x128xf32>
    %cst_49 = arith.constant 0.000000e+00 : f32
    %176 = vector.broadcast %cst_49 : f32 to vector<8x128xf32>
    %177 = arith.cmpf ogt, %163, %176 : vector<8x128xf32>
    %178 = tpu.reciprocal %164 {approx = true} : vector<8x128xf32> -> vector<8x128xf32>
    %179 = arith.mulf %175, %178 : vector<8x128xf32>
    %cst_50 = arith.constant 2.000000e+00 : f32
    %180 = vector.broadcast %cst_50 : f32 to vector<8x128xf32>
    %181 = arith.select %177, %179, %180 : vector<8x128xi1>, vector<8x128xf32>
    %182 = arith.mulf %156, %181 : vector<8x128xf32>
    %183 = arith.mulf %157, %181 : vector<8x128xf32>
    %184 = arith.mulf %158, %181 : vector<8x128xf32>
    %185 = vector.extract_strided_slice %182 {offsets = [0, 0], sizes = [8, 16], strides = [1, 1]} : vector<8x128xf32> to vector<8x16xf32>
    %c0_51 = arith.constant 0 : index
    %c0_52 = arith.constant 0 : index
    %186 = vector.load %arg13[%c0_51, %c0_52] : memref<16x128xf32, #tpu.memory_space<vmem>>, vector<16x128xf32>
    %cst_53 = arith.constant dense<0.000000e+00> : vector<8x128xf32>
    %187 = tpu.matmul %185, %186, %cst_53 {dimension_numbers = #tpu.dot_dimension_numbers<[1], [0], [0], [1], [0, 0, 1, 1], [], []>} : vector<8x16xf32>, vector<16x128xf32>, vector<8x128xf32> -> vector<8x128xf32>
    %188 = vector.extract_strided_slice %183 {offsets = [0, 0], sizes = [8, 16], strides = [1, 1]} : vector<8x128xf32> to vector<8x16xf32>
    %c0_54 = arith.constant 0 : index
    %c0_55 = arith.constant 0 : index
    %189 = vector.load %arg14[%c0_54, %c0_55] : memref<16x128xf32, #tpu.memory_space<vmem>>, vector<16x128xf32>
    %cst_56 = arith.constant dense<0.000000e+00> : vector<8x128xf32>
    %190 = tpu.matmul %188, %189, %cst_56 {dimension_numbers = #tpu.dot_dimension_numbers<[1], [0], [0], [1], [0, 0, 1, 1], [], []>} : vector<8x16xf32>, vector<16x128xf32>, vector<8x128xf32> -> vector<8x128xf32>
    %191 = arith.addf %187, %190 : vector<8x128xf32>
    %192 = vector.extract_strided_slice %184 {offsets = [0, 0], sizes = [8, 16], strides = [1, 1]} : vector<8x128xf32> to vector<8x16xf32>
    %c0_57 = arith.constant 0 : index
    %c0_58 = arith.constant 0 : index
    %193 = vector.load %arg15[%c0_57, %c0_58] : memref<16x128xf32, #tpu.memory_space<vmem>>, vector<16x128xf32>
    %cst_59 = arith.constant dense<0.000000e+00> : vector<8x128xf32>
    %194 = tpu.matmul %192, %193, %cst_59 {dimension_numbers = #tpu.dot_dimension_numbers<[1], [0], [0], [1], [0, 0, 1, 1], [], []>} : vector<8x16xf32>, vector<16x128xf32>, vector<8x128xf32> -> vector<8x128xf32>
    %195 = arith.addf %191, %194 : vector<8x128xf32>
    %c0_60 = arith.constant 0 : index
    %c0_61 = arith.constant 0 : index
    %196 = vector.load %arg16[%c0_60, %c0_61] : memref<8x128xf32, #tpu.memory_space<vmem>>, vector<8x128xf32>
    tpu.vector_store %arg16[%c0_60, %c0_61], %195 {strides = array<i32>} : memref<8x128xf32, #tpu.memory_space<vmem>>, vector<8x128xf32>,
    return
  }
  func.func @transform_0(%arg0: i32) -> (i32, i32) {
    %c0_i32 = arith.constant 0 : i32
    %c0_i32_0 = arith.constant 0 : i32
    return %arg0, %c0_i32 : i32, i32
  }
  func.func @transform_1(%arg0: i32) -> (i32, i32) {
    %c0_i32 = arith.constant 0 : i32
    %c0_i32_0 = arith.constant 0 : i32
    return %arg0, %c0_i32 : i32, i32
  }
  func.func @transform_2(%arg0: i32) -> (i32, i32) {
    %c0_i32 = arith.constant 0 : i32
    %c0_i32_0 = arith.constant 0 : i32
    %c0_i32_1 = arith.constant 0 : i32
    return %c0_i32, %c0_i32_0 : i32, i32
  }
  func.func @transform_3(%arg0: i32) -> (i32, i32) {
    %c0_i32 = arith.constant 0 : i32
    %c0_i32_0 = arith.constant 0 : i32
    %c0_i32_1 = arith.constant 0 : i32
    return %c0_i32, %c0_i32_0 : i32, i32
  }
  func.func @transform_4(%arg0: i32) -> (i32, i32) {
    %c0_i32 = arith.constant 0 : i32
    %c0_i32_0 = arith.constant 0 : i32
    %c0_i32_1 = arith.constant 0 : i32
    return %c0_i32, %c0_i32_0 : i32, i32
  }
  func.func @transform_5(%arg0: i32) -> (i32, i32) {
    %c0_i32 = arith.constant 0 : i32
    %c0_i32_0 = arith.constant 0 : i32
    %c0_i32_1 = arith.constant 0 : i32
    return %c0_i32, %c0_i32_0 : i32, i32
  }
  func.func @transform_6(%arg0: i32) -> (i32, i32) {
    %c0_i32 = arith.constant 0 : i32
    %c0_i32_0 = arith.constant 0 : i32
    %c0_i32_1 = arith.constant 0 : i32
    return %c0_i32, %c0_i32_0 : i32, i32
  }
  func.func @transform_7(%arg0: i32) -> (i32, i32) {
    %c0_i32 = arith.constant 0 : i32
    %c0_i32_0 = arith.constant 0 : i32
    %c0_i32_1 = arith.constant 0 : i32
    return %c0_i32, %c0_i32_0 : i32, i32
  }
  func.func @transform_8(%arg0: i32) -> (i32, i32) {
    %c0_i32 = arith.constant 0 : i32
    %c0_i32_0 = arith.constant 0 : i32
    %c0_i32_1 = arith.constant 0 : i32
    return %c0_i32, %c0_i32_0 : i32, i32
  }
  func.func @transform_9(%arg0: i32) -> (i32, i32) {
    %c0_i32 = arith.constant 0 : i32
    %c0_i32_0 = arith.constant 0 : i32
    %c0_i32_1 = arith.constant 0 : i32
    return %c0_i32, %c0_i32_0 : i32, i32
  }
  func.func @transform_10(%arg0: i32) -> (i32, i32) {
    %c0_i32 = arith.constant 0 : i32
    %c0_i32_0 = arith.constant 0 : i32
    %c0_i32_1 = arith.constant 0 : i32
    return %c0_i32, %c0_i32_0 : i32, i32
  }
  func.func @transform_11(%arg0: i32) -> (i32, i32) {
    %c0_i32 = arith.constant 0 : i32
    %c0_i32_0 = arith.constant 0 : i32
    %c0_i32_1 = arith.constant 0 : i32
    return %c0_i32, %c0_i32_0 : i32, i32
  }
  func.func @transform_12(%arg0: i32) -> (i32, i32) {
    %c0_i32 = arith.constant 0 : i32
    %c0_i32_0 = arith.constant 0 : i32
    %c0_i32_1 = arith.constant 0 : i32
    return %c0_i32, %c0_i32_0 : i32, i32
  }
  func.func @transform_13(%arg0: i32) -> (i32, i32) {
    %c0_i32 = arith.constant 0 : i32
    %c0_i32_0 = arith.constant 0 : i32
    %c0_i32_1 = arith.constant 0 : i32
    return %c0_i32, %c0_i32_0 : i32, i32
  }
  func.func @transform_14(%arg0: i32) -> (i32, i32) {
    %c0_i32 = arith.constant 0 : i32
    %c0_i32_0 = arith.constant 0 : i32
    %c0_i32_1 = arith.constant 0 : i32
    return %c0_i32, %c0_i32_0 : i32, i32
  }
  func.func @transform_15(%arg0: i32) -> (i32, i32) {
    %c0_i32 = arith.constant 0 : i32
    %c0_i32_0 = arith.constant 0 : i32
    return %arg0, %c0_i32 : i32, i32
  }
}

</mosaic_0001>

<llo_original>
// kernel: tpu_custom_call.1
$region0: #{tpu_custom_call.1}
  #allocation0 [shape = 'u32[]', space=smem, size = 0x4, offset = 0x4, fixed_abs, tag = 'smem constant byte address 0x4 - core index']
  #allocation1 [shape = 'u32[144,128]{1,0:T(1,128)}', space=vmem, size = 0x12000, scoped, tag = 'internal scratch']
  %s0 = inlined_call_operand.hbm [shape: f32[8,45], index: 0, kind: input, shape index: {}]
  %s1 = inlined_call_operand.hbm [shape: f32[8,10], index: 1, kind: input, shape index: {}]
  %s2 = inlined_call_operand.vmem [shape: bf16[45,128], index: 2, kind: input, shape index: {}]
  %s3 = inlined_call_operand.vmem [shape: f32[1,128], index: 3, kind: input, shape index: {}]
  %s4 = inlined_call_operand.vmem [shape: bf16[128,20], index: 4, kind: input, shape index: {}]
  %s5 = inlined_call_operand.hbm [shape: f32[1,20], index: 5, kind: input, shape index: {}]
  %s6 = inlined_call_operand.hbm [shape: bf16[10,128], index: 6, kind: input, shape index: {}]
  %s7 = inlined_call_operand.hbm [shape: f32[1,128], index: 7, kind: input, shape index: {}]
  %s8 = inlined_call_operand.vmem [shape: bf16[128,128], index: 8, kind: input, shape index: {}]
  %s9 = inlined_call_operand.hbm [shape: f32[1,128], index: 9, kind: input, shape index: {}]
  %s10 = inlined_call_operand.hbm [shape: bf16[128,768], index: 10, kind: input, shape index: {}]
  %s11 = inlined_call_operand.hbm [shape: f32[1,768], index: 11, kind: input, shape index: {}]
  %s12 = inlined_call_operand.vmem [shape: f32[16,128], index: 12, kind: input, shape index: {}]
  %s13 = inlined_call_operand.vmem [shape: f32[16,128], index: 13, kind: input, shape index: {}]
  %s14 = inlined_call_operand.hbm [shape: f32[16,128], index: 14, kind: input, shape index: {}]
  %s15 = inlined_call_operand.hbm [shape: f32[8,128], index: 15, kind: output, shape index: {}]
  %s16 = sld [smem:[#allocation0]]
  $region106: #{tpu_custom_call.1} parent=0
    _
  %s18 = ssub.s32 1, %s16
  %s19 = scalar_select 0, %s18, %s16
  $region1: #{tpu_custom_call.1} parent=0
    #allocation2 [shape = 'u8[4096]{0}', space=vmem, size = 0x1000, scoped, tag = 'input window, operand 0, single buffered']
    #allocation3 [shape = 's32[1]{0}', space=sflag, size = 0x4, scoped, tag = 'scoped memory for tpu_custom_call.1']
    #allocation4 [shape = 's32[1]{0}', space=sflag, size = 0x4, scoped, tag = 'scoped memory for tpu_custom_call.1']
    #allocation5 [shape = 'u8[4096]{0}', space=vmem, size = 0x1000, scoped, tag = 'input window, operand 1, single buffered']
    #allocation6 [shape = 's32[1]{0}', space=sflag, size = 0x4, scoped, tag = 'scoped memory for tpu_custom_call.1']
    #allocation7 [shape = 'u8[512]{0}', space=vmem, size = 0x400, scoped, tag = 'input window, operand 5, single buffered']
    #allocation8 [shape = 'u8[4096]{0}', space=vmem, size = 0x1000, scoped, tag = 'input window, operand 6, single buffered']
    #allocation9 [shape = 's32[1]{0}', space=sflag, size = 0x4, scoped, tag = 'scoped memory for tpu_custom_call.1']
    #allocation10 [shape = 'u8[512]{0}', space=vmem, size = 0x400, scoped, tag = 'input window, operand 7, single buffered']
    #allocation11 [shape = 'u8[512]{0}', space=vmem, size = 0x400, scoped, tag = 'input window, operand 9, single buffered']
    #allocation12 [shape = 's32[1]{0}', space=sflag, size = 0x4, scoped, tag = 'scoped memory for tpu_custom_call.1']
    #allocation13 [shape = 'u8[196608]{0}', space=vmem, size = 0x30000, scoped, tag = 'input window, operand 10, single buffered']
    #allocation14 [shape = 'u8[3072]{0}', space=vmem, size = 0xc00, scoped, tag = 'input window, operand 11, single buffered']
    #allocation15 [shape = 's32[1]{0}', space=sflag, size = 0x4, scoped, tag = 'scoped memory for tpu_custom_call.1']
    #allocation16 [shape = 'u8[8192]{0}', space=vmem, size = 0x2000, scoped, tag = 'input window, operand 14, single buffered']
    #allocation17 [shape = 'u8[4096]{0}', space=vmem, size = 0x1000, scoped, tag = 'output window, operand 0, single buffered']
    %20 = vsyncpa [#allocation3], 0
    %21 = vsyncpa [#allocation6], 0
    %22 = vsyncpa [#allocation9], 0
    %23 = vsyncpa [#allocation12], 0
    %24 = vsyncpa [#allocation15], 0
    %25 = vsyncpa [#allocation4], 0
    // Predicated region
    $region2: #{tpu_custom_call.1} parent=1 // pred_check
      _
    $region3: #{tpu_custom_call.1} parent=1 // pred_check_branch
      %27 = sbr.rel (0) target = $region5
    $region4: #{tpu_custom_call.1} parent=1 // pred_region
      %s29 = ssub.s32 128, 128
      %30 = vsyncadd [#allocation3], %s29
      %s32 = sshll.u32 [#allocation2], 4
      %s33 = int_to_ptr.vmem [resolvable:$true] %s32
      %35 = dma.hbm_to_vmem [thread:$0]  %s0, 128, %s33, [#allocation3]
    $region5: #{tpu_custom_call.1} parent=1 // pred_fallthru
      _
    // Predicated region
    $region6: #{tpu_custom_call.1} parent=1 // pred_check
      _
    $region7: #{tpu_custom_call.1} parent=1 // pred_check_branch
      %37 = sbr.rel (0) target = $region9
    $region8: #{tpu_custom_call.1} parent=1 // pred_region
      %s39 = ssub.s32 128, 128
      %40 = vsyncadd [#allocation6], %s39
      %s42 = sshll.u32 [#allocation5], 4
      %s43 = int_to_ptr.vmem [resolvable:$true] %s42
      %45 = dma.hbm_to_vmem [thread:$0]  %s1, 128, %s43, [#allocation6]
    $region9: #{tpu_custom_call.1} parent=1 // pred_fallthru
      _
    // Predicated region
    $region10: #{tpu_custom_call.1} parent=1 // pred_check
      _
    $region11: #{tpu_custom_call.1} parent=1 // pred_check_branch
      %47 = sbr.rel (0) target = $region13
    $region12: #{tpu_custom_call.1} parent=1 // pred_region
      _
    $region13: #{tpu_custom_call.1} parent=1 // pred_fallthru
      _
    // Predicated region
    $region14: #{tpu_custom_call.1} parent=1 // pred_check
      _
    $region15: #{tpu_custom_call.1} parent=1 // pred_check_branch
      %49 = sbr.rel (0) target = $region17
    $region16: #{tpu_custom_call.1} parent=1 // pred_region
      _
    $region17: #{tpu_custom_call.1} parent=1 // pred_fallthru
      _
    // Predicated region
    $region18: #{tpu_custom_call.1} parent=1 // pred_check
      _
    $region19: #{tpu_custom_call.1} parent=1 // pred_check_branch
      %51 = sbr.rel (0) target = $region21
    $region20: #{tpu_custom_call.1} parent=1 // pred_region
      _
    $region21: #{tpu_custom_call.1} parent=1 // pred_fallthru
      _
    // Predicated region
    $region22: #{tpu_custom_call.1} parent=1 // pred_check
      _
    $region23: #{tpu_custom_call.1} parent=1 // pred_check_branch
      %53 = sbr.rel (0) target = $region25
    $region24: #{tpu_custom_call.1} parent=1 // pred_region
      %s55 = ssub.s32 16, 16
      %56 = vsyncadd [#allocation6], %s55
      %s58 = sshll.u32 [#allocation7], 4
      %s59 = int_to_ptr.vmem [resolvable:$true] %s58
      %61 = dma.hbm_to_vmem [thread:$0]  %s5, 16, %s59, [#allocation6]
    $region25: #{tpu_custom_call.1} parent=1 // pred_fallthru
      _
    // Predicated region
    $region26: #{tpu_custom_call.1} parent=1 // pred_check
      _
    $region27: #{tpu_custom_call.1} parent=1 // pred_check_branch
      %63 = sbr.rel (0) target = $region29
    $region28: #{tpu_custom_call.1} parent=1 // pred_region
      %s65 = ssub.s32 128, 128
      %66 = vsyncadd [#allocation9], %s65
      %s67 = sshll.u32 [#allocation8], 4
      %s68 = int_to_ptr.vmem [resolvable:$true] %s67
      %73 = dma.hbm_to_vmem [thread:$0]  %s6, 128, %s68, [#allocation9], 64, 64, 4
    $region29: #{tpu_custom_call.1} parent=1 // pred_fallthru
      _
    // Predicated region
    $region30: #{tpu_custom_call.1} parent=1 // pred_check
      _
    $region31: #{tpu_custom_call.1} parent=1 // pred_check_branch
      %75 = sbr.rel (0) target = $region33
    $region32: #{tpu_custom_call.1} parent=1 // pred_region
      %s77 = ssub.s32 16, 16
      %78 = vsyncadd [#allocation9], %s77
      %s80 = sshll.u32 [#allocation10], 4
      %s81 = int_to_ptr.vmem [resolvable:$true] %s80
      %83 = dma.hbm_to_vmem [thread:$0]  %s7, 16, %s81, [#allocation9]
    $region33: #{tpu_custom_call.1} parent=1 // pred_fallthru
      _
    // Predicated region
    $region34: #{tpu_custom_call.1} parent=1 // pred_check
      _
    $region35: #{tpu_custom_call.1} parent=1 // pred_check_branch
      %85 = sbr.rel (0) target = $region37
    $region36: #{tpu_custom_call.1} parent=1 // pred_region
      _
    $region37: #{tpu_custom_call.1} parent=1 // pred_fallthru
      _
    // Predicated region
    $region38: #{tpu_custom_call.1} parent=1 // pred_check
      _
    $region39: #{tpu_custom_call.1} parent=1 // pred_check_branch
      %87 = sbr.rel (0) target = $region41
    $region40: #{tpu_custom_call.1} parent=1 // pred_region
      %s89 = ssub.s32 16, 16
      %90 = vsyncadd [#allocation12], %s89
      %s92 = sshll.u32 [#allocation11], 4
      %s93 = int_to_ptr.vmem [resolvable:$true] %s92
      %95 = dma.hbm_to_vmem [thread:$0]  %s9, 16, %s93, [#allocation12]
    $region41: #{tpu_custom_call.1} parent=1 // pred_fallthru
      _
    // Predicated region
    $region42: #{tpu_custom_call.1} parent=1 // pred_check
      _
    $region43: #{tpu_custom_call.1} parent=1 // pred_check_branch
      %97 = sbr.rel (0) target = $region45
    $region44: #{tpu_custom_call.1} parent=1 // pred_region
      %s99 = ssub.s32 6144, 6144
      %100 = vsyncadd [#allocation12], %s99
      %s101 = sshll.u32 [#allocation13], 4
      %s102 = int_to_ptr.vmem [resolvable:$true] %s101
      %107 = dma.hbm_to_vmem [thread:$0]  %s10, 6144, %s102, [#allocation12], 384, 384, 24
    $region45: #{tpu_custom_call.1} parent=1 // pred_fallthru
      _
    // Predicated region
    $region46: #{tpu_custom_call.1} parent=1 // pred_check
      _
    $region47: #{tpu_custom_call.1} parent=1 // pred_check_branch
      %109 = sbr.rel (0) target = $region49
    $region48: #{tpu_custom_call.1} parent=1 // pred_region
      %s111 = ssub.s32 96, 96
      %112 = vsyncadd [#allocation15], %s111
      %s114 = sshll.u32 [#allocation14], 4
      %s115 = int_to_ptr.vmem [resolvable:$true] %s114
      %117 = dma.hbm_to_vmem [thread:$0]  %s11, 96, %s115, [#allocation15]
    $region49: #{tpu_custom_call.1} parent=1 // pred_fallthru
      _
    // Predicated region
    $region50: #{tpu_custom_call.1} parent=1 // pred_check
      _
    $region51: #{tpu_custom_call.1} parent=1 // pred_check_branch
      %119 = sbr.rel (0) target = $region53
    $region52: #{tpu_custom_call.1} parent=1 // pred_region
      _
    $region53: #{tpu_custom_call.1} parent=1 // pred_fallthru
      _
    // Predicated region
    $region54: #{tpu_custom_call.1} parent=1 // pred_check
      _
    $region55: #{tpu_custom_call.1} parent=1 // pred_check_branch
      %121 = sbr.rel (0) target = $region57
    $region56: #{tpu_custom_call.1} parent=1 // pred_region
      _
    $region57: #{tpu_custom_call.1} parent=1 // pred_fallthru
      _
    // Predicated region
    $region58: #{tpu_custom_call.1} parent=1 // pred_check
      _
    $region59: #{tpu_custom_call.1} parent=1 // pred_check_branch
      %123 = sbr.rel (0) target = $region61
    $region60: #{tpu_custom_call.1} parent=1 // pred_region
      %s125 = ssub.s32 256, 256
      %126 = vsyncadd [#allocation15], %s125
      %s127 = sshll.u32 [#allocation16], 4
      %s128 = int_to_ptr.vmem [resolvable:$true] %s127
      %133 = dma.hbm_to_vmem [thread:$0]  %s14, 256, %s128, [#allocation15], 128, 128, 8
    $region61: #{tpu_custom_call.1} parent=1 // pred_fallthru
      _
    // Predicated region
    $region62: #{tpu_custom_call.1} parent=1 // pred_check
      _
    $region63: #{tpu_custom_call.1} parent=1 // pred_check_branch
      %135 = sbr.rel (0) target = $region65
    $region64: #{tpu_custom_call.1} parent=1 // pred_region
      %136 = dma.done [#allocation3], 128
    $region65: #{tpu_custom_call.1} parent=1 // pred_fallthru
      _
    // Predicated region
    $region66: #{tpu_custom_call.1} parent=1 // pred_check
      _
    $region67: #{tpu_custom_call.1} parent=1 // pred_check_branch
      %138 = sbr.rel (0) target = $region69
    $region68: #{tpu_custom_call.1} parent=1 // pred_region
      %139 = dma.done [#allocation6], 128
    $region69: #{tpu_custom_call.1} parent=1 // pred_fallthru
      _
    // Predicated region
    $region70: #{tpu_custom_call.1} parent=1 // pred_check
      _
    $region71: #{tpu_custom_call.1} parent=1 // pred_check_branch
      %141 = sbr.rel (0) target = $region73
    $region72: #{tpu_custom_call.1} parent=1 // pred_region
      %142 = dma.done [#allocation6], 16
    $region73: #{tpu_custom_call.1} parent=1 // pred_fallthru
      _
    // Predicated region
    $region74: #{tpu_custom_call.1} parent=1 // pred_check
      _
    $region75: #{tpu_custom_call.1} parent=1 // pred_check_branch
      %144 = sbr.rel (0) target = $region77
    $region76: #{tpu_custom_call.1} parent=1 // pred_region
      %145 = dma.done [#allocation9], 128
    $region77: #{tpu_custom_call.1} parent=1 // pred_fallthru
      _
    // Predicated region
    $region78: #{tpu_custom_call.1} parent=1 // pred_check
      _
    $region79: #{tpu_custom_call.1} parent=1 // pred_check_branch
      %147 = sbr.rel (0) target = $region81
    $region80: #{tpu_custom_call.1} parent=1 // pred_region
      %148 = dma.done [#allocation9], 16
    $region81: #{tpu_custom_call.1} parent=1 // pred_fallthru
      _
    // Predicated region
    $region82: #{tpu_custom_call.1} parent=1 // pred_check
      _
    $region83: #{tpu_custom_call.1} parent=1 // pred_check_branch
      %150 = sbr.rel (0) target = $region85
    $region84: #{tpu_custom_call.1} parent=1 // pred_region
      %151 = dma.done [#allocation12], 16
    $region85: #{tpu_custom_call.1} parent=1 // pred_fallthru
      _
    // Predicated region
    $region86: #{tpu_custom_call.1} parent=1 // pred_check
      _
    $region87: #{tpu_custom_call.1} parent=1 // pred_check_branch
      %153 = sbr.rel (0) target = $region89
    $region88: #{tpu_custom_call.1} parent=1 // pred_region
      %154 = dma.done [#allocation12], 6144
    $region89: #{tpu_custom_call.1} parent=1 // pred_fallthru
      _
    // Predicated region
    $region90: #{tpu_custom_call.1} parent=1 // pred_check
      _
    $region91: #{tpu_custom_call.1} parent=1 // pred_check_branch
      %156 = sbr.rel (0) target = $region93
    $region92: #{tpu_custom_call.1} parent=1 // pred_region
      %157 = dma.done [#allocation15], 96
    $region93: #{tpu_custom_call.1} parent=1 // pred_fallthru
      _
    // Predicated region
    $region94: #{tpu_custom_call.1} parent=1 // pred_check
      _
    $region95: #{tpu_custom_call.1} parent=1 // pred_check_branch
      %159 = sbr.rel (0) target = $region97
    $region96: #{tpu_custom_call.1} parent=1 // pred_region
      %160 = dma.done [#allocation15], 256
    $region97: #{tpu_custom_call.1} parent=1 // pred_fallthru
      _
    %v162 = vld [vmem:[#allocation2] sm:$0xff]
    %v163 = vpack.c.bf16 %v162, %v162
    %v164 = vld [vmem:[%s2] sm:$0xf]
    %v165 = vld [vmem:[%s2 + $0x4] sm:$0xf]
    %v166 = vld [vmem:[%s2 + $0x8] sm:$0xf]
    %v167 = vld [vmem:[%s2 + $0xc] sm:$0xf]
    %v168 = vld [vmem:[%s2 + $0x10] sm:$0xf]
    %v169 = vld [vmem:[%s2 + $0x14] sm:$0x7]
    %v170 = vld [vmem:[%s3] sm:$0x1]
    %v172 = vlaneseq
    %v173 = vshrl.u32 %v172, 7
    %v174 = vsub.s32 0, %v173
    %v175 = vrot.slane %v170, %v174
    %v183 = vunpack.c.l.b16 %v164
    %v184 = vunpack.c.l.b16 %v165
    %v185 = vunpack.c.l.b16 %v166
    %v186 = vunpack.c.l.b16 %v167
    %v187 = vunpack.c.l.b16 %v168
    %v188 = vunpack.c.l.b16 %v169
    %v189 = vpack.c.b16 %v184, %v183
    %v190 = vpack.c.b16 %v186, %v185
    %v191 = vpack.c.b16 %v188, %v187
    %vm194 = vcmask 367616
    %v196 = vsel %vm194, %v163, 0
    %vm198 = vcmask 1045504
    %vm199 = vcmask 1046528
    %v200 = vsel %vm198, 4294967295, 65535
    %v201 = vsel %vm199, %v200, 0
    %v203 = vand.u32 %v191, %v201
    %205 = vmatprep.subr.bf16.mxu0 0
    %206 = vmatpush1.bf16.msra.mxu0 %v189
    %207 = vmatprep.subr.bf16.mxu0 0
    %208 = vmatpush1.bf16.msra.mxu0 %v190
    %209 = vmatprep.subr.bf16.mxu0 0
    %210 = vmatpush1.bf16.msra.mxu0 %v203
    %211 = vmatprep.subr.bf16.mxu0 0
    %212 = vmatpush1.bf16.msra.mxu0 0
    %213 = vmatprep.subr.bf16.mxu0 0
    %214 = vmatpush1.bf16.msra.mxu0 0
    %215 = vmatprep.subr.bf16.mxu0 0
    %216 = vmatpush1.bf16.msra.mxu0 0
    %217 = vmatprep.subr.bf16.mxu0 0
    %218 = vmatpush1.bf16.msra.mxu0 0
    %219 = vmatprep.subr.bf16.mxu0 0
    %220 = vmatpush1.bf16.msra.mxu0 0
    %221 = vmatprep.subr.bf16.mxu0 0
    %222 = vmatpush1.bf16.msra.mxu0 0
    %223 = vmatprep.subr.bf16.mxu0 0
    %224 = vmatpush1.bf16.msra.mxu0 0
    %225 = vmatprep.subr.bf16.mxu0 0
    %226 = vmatpush1.bf16.msra.mxu0 0
    %227 = vmatprep.subr.bf16.mxu0 0
    %228 = vmatpush1.bf16.msra.mxu0 0
    %229 = vmatprep.subr.bf16.mxu0 0
    %230 = vmatpush1.bf16.msra.mxu0 0
    %231 = vmatprep.subr.bf16.mxu0 0
    %232 = vmatpush1.bf16.msra.mxu0 0
    %233 = vmatprep.subr.bf16.mxu0 0
    %234 = vmatpush1.bf16.msra.mxu0 0
    %235 = vmatprep.subr.bf16.mxu0 0
    %236 = vmatpush1.bf16.msra.mxu0 0
    %237 = vmatprep.mubr.bf16.mxu0 0
    %238 = vmatmul.mubr.bf16.gmra.mrb[0].mxu0 %v196
    %v239 = vpop.f32.mrb[0].mxu0
    %v240 = vadd.f32 %v175, %v239
    %v241 = vpop.f32.mrb[0].mxu0
    %v242 = vpop.f32.mrb[0].mxu0
    %v243 = vpop.f32.mrb[0].mxu0
    %244 = vdwg.mxu0
    %vm245 = vcmp.ge.f32.partialorder %v240, 0.0
    %v246 = vmul.f32 %v240, 0.01
    %v247 = vsel %vm245, %v240, %v246
    %v248 = vpack.c.bf16 %v247, %v247
    %v249 = vld [vmem:[%s4] sm:$0xf]
    %v250 = vld [vmem:[%s4 + $0x4] sm:$0xf]
    %v251 = vld [vmem:[%s4 + $0x8] sm:$0xf]
    %v252 = vld [vmem:[%s4 + $0xc] sm:$0xf]
    %v253 = vld [vmem:[%s4 + $0x10] sm:$0xf]
    %v254 = vld [vmem:[%s4 + $0x14] sm:$0xf]
    %v255 = vld [vmem:[%s4 + $0x18] sm:$0xf]
    %v256 = vld [vmem:[%s4 + $0x1c] sm:$0xf]
    %v257 = vld [vmem:[%s4 + $0x20] sm:$0xf]
    %v258 = vld [vmem:[%s4 + $0x24] sm:$0xf]
    %v259 = vld [vmem:[%s4 + $0x28] sm:$0xf]
    %v260 = vld [vmem:[%s4 + $0x2c] sm:$0xf]
    %v261 = vld [vmem:[%s4 + $0x30] sm:$0xf]
    %v262 = vld [vmem:[%s4 + $0x34] sm:$0xf]
    %v263 = vld [vmem:[%s4 + $0x38] sm:$0xf]
    %v264 = vld [vmem:[%s4 + $0x3c] sm:$0xf]
    %v265 = vld [vmem:[#allocation7] sm:$0x1]
    %v267 = vlaneseq
    %v268 = vshrl.u32 %v267, 7
    %v269 = vsub.s32 0, %v268
    %v270 = vrot.slane %v265, %v269
    %v288 = vunpack.c.l.b16 %v249
    %v289 = vunpack.c.l.b16 %v250
    %v290 = vunpack.c.l.b16 %v251
    %v291 = vunpack.c.l.b16 %v252
    %v292 = vunpack.c.l.b16 %v253
    %v293 = vunpack.c.l.b16 %v254
    %v294 = vunpack.c.l.b16 %v255
    %v295 = vunpack.c.l.b16 %v256
    %v296 = vunpack.c.l.b16 %v257
    %v297 = vunpack.c.l.b16 %v258
    %v298 = vunpack.c.l.b16 %v259
    %v299 = vunpack.c.l.b16 %v260
    %v300 = vunpack.c.l.b16 %v261
    %v301 = vunpack.c.l.b16 %v262
    %v302 = vunpack.c.l.b16 %v263
    %v303 = vunpack.c.l.b16 %v264
    %v304 = vpack.c.b16 %v289, %v288
    %v305 = vpack.c.b16 %v291, %v290
    %v306 = vpack.c.b16 %v293, %v292
    %v307 = vpack.c.b16 %v295, %v294
    %v308 = vpack.c.b16 %v297, %v296
    %v309 = vpack.c.b16 %v299, %v298
    %v310 = vpack.c.b16 %v301, %v300
    %v311 = vpack.c.b16 %v303, %v302
    %320 = vmatprep.subr.bf16.mxu0 0
    %321 = vmatpush1.bf16.msra.mxu0 %v304
    %322 = vmatprep.subr.bf16.mxu0 0
    %323 = vmatpush1.bf16.msra.mxu0 %v305
    %324 = vmatprep.subr.bf16.mxu0 0
    %325 = vmatpush1.bf16.msra.mxu0 %v306
    %326 = vmatprep.subr.bf16.mxu0 0
    %327 = vmatpush1.bf16.msra.mxu0 %v307
    %328 = vmatprep.subr.bf16.mxu0 0
    %329 = vmatpush1.bf16.msra.mxu0 %v308
    %330 = vmatprep.subr.bf16.mxu0 0
    %331 = vmatpush1.bf16.msra.mxu0 %v309
    %332 = vmatprep.subr.bf16.mxu0 0
    %333 = vmatpush1.bf16.msra.mxu0 %v310
    %334 = vmatprep.subr.bf16.mxu0 0
    %335 = vmatpush1.bf16.msra.mxu0 %v311
    %336 = vmatprep.subr.bf16.mxu0 0
    %337 = vmatpush1.bf16.msra.mxu0 0
    %338 = vmatprep.subr.bf16.mxu0 0
    %339 = vmatpush1.bf16.msra.mxu0 0
    %340 = vmatprep.subr.bf16.mxu0 0
    %341 = vmatpush1.bf16.msra.mxu0 0
    %342 = vmatprep.subr.bf16.mxu0 0
    %343 = vmatpush1.bf16.msra.mxu0 0
    %344 = vmatprep.subr.bf16.mxu0 0
    %345 = vmatpush1.bf16.msra.mxu0 0
    %346 = vmatprep.subr.bf16.mxu0 0
    %347 = vmatpush1.bf16.msra.mxu0 0
    %348 = vmatprep.subr.bf16.mxu0 0
    %349 = vmatpush1.bf16.msra.mxu0 0
    %350 = vmatprep.subr.bf16.mxu0 0
    %351 = vmatpush1.bf16.msra.mxu0 0
    %352 = vmatprep.mubr.bf16.mxu0 0
    %353 = vmatmul.mubr.bf16.gmra.mrb[0].mxu0 %v248
    %v354 = vpop.f32.mrb[0].mxu0
    %v355 = vadd.f32 %v270, %v354
    %v356 = vpop.f32.mrb[0].mxu0
    %v357 = vpop.f32.mrb[0].mxu0
    %v358 = vpop.f32.mrb[0].mxu0
    %359 = vdwg.mxu0
    %v360 = vmax.f32 %v355, 0.0
    %v361 = vand.u32 2147483647, %v355
    %v362 = vsub.f32 0.0, %v361
    %v363 = vmul.f32 %v362, 1.442695
    %v364 = vpow.pop %v363
    %v365 = vadd.f32 %v364, 1.0
    %v366 = vlog2.pop %v365
    %v367 = vmul.f32 %v366, 0.6931472
    %v368 = vadd.f32 %v360, %v367
    %v369 = vld [vmem:[#allocation5] sm:$0xff]
    %371 = vrot.lane.b32.xlu0 %v369, 10
    %v372 = vpop.permute.xlu0 %371
    %v374 = vmul.f32 %v368, %v372
    %376 = vrot.lane.b32.xlu0 %v374, 118
    %v377 = vpop.permute.xlu0 %376
    %v379 = vadd.f32 %v355, %v377
    %v380 = vpack.c.bf16 %v379, %v379
    %v381 = vld [vmem:[#allocation8] sm:$0xf]
    %v382 = vld [vmem:[#allocation8 + $0x4] sm:$0x1]
    %v383 = vld [vmem:[#allocation10] sm:$0x1]
    %v385 = vlaneseq
    %v386 = vshrl.u32 %v385, 7
    %v387 = vsub.s32 0, %v386
    %v388 = vrot.slane %v383, %v387
    %v392 = vunpack.c.l.b16 %v381
    %v393 = vunpack.c.l.b16 %v382
    %v394 = vpack.c.b16 %v393, %v392
    %vm395 = vcmask 80896
    %v397 = vsel %vm395, %v380, 0
    %vm399 = vcmask 1044480
    %v401 = vsel %vm399, %v394, 0
    %403 = vmatprep.subr.bf16.mxu0 0
    %404 = vmatpush1.bf16.msra.mxu0 %v401
    %405 = vmatprep.subr.bf16.mxu0 0
    %406 = vmatpush1.bf16.msra.mxu0 0
    %407 = vmatprep.subr.bf16.mxu0 0
    %408 = vmatpush1.bf16.msra.mxu0 0
    %409 = vmatprep.subr.bf16.mxu0 0
    %410 = vmatpush1.bf16.msra.mxu0 0
    %411 = vmatprep.subr.bf16.mxu0 0
    %412 = vmatpush1.bf16.msra.mxu0 0
    %413 = vmatprep.subr.bf16.mxu0 0
    %414 = vmatpush1.bf16.msra.mxu0 0
    %415 = vmatprep.subr.bf16.mxu0 0
    %416 = vmatpush1.bf16.msra.mxu0 0
    %417 = vmatprep.subr.bf16.mxu0 0
    %418 = vmatpush1.bf16.msra.mxu0 0
    %419 = vmatprep.subr.bf16.mxu0 0
    %420 = vmatpush1.bf16.msra.mxu0 0
    %421 = vmatprep.subr.bf16.mxu0 0
    %422 = vmatpush1.bf16.msra.mxu0 0
    %423 = vmatprep.subr.bf16.mxu0 0
    %424 = vmatpush1.bf16.msra.mxu0 0
    %425 = vmatprep.subr.bf16.mxu0 0
    %426 = vmatpush1.bf16.msra.mxu0 0
    %427 = vmatprep.subr.bf16.mxu0 0
    %428 = vmatpush1.bf16.msra.mxu0 0
    %429 = vmatprep.subr.bf16.mxu0 0
    %430 = vmatpush1.bf16.msra.mxu0 0
    %431 = vmatprep.subr.bf16.mxu0 0
    %432 = vmatpush1.bf16.msra.mxu0 0
    %433 = vmatprep.subr.bf16.mxu0 0
    %434 = vmatpush1.bf16.msra.mxu0 0
    %435 = vmatprep.mubr.bf16.mxu0 0
    %436 = vmatmul.mubr.bf16.gmra.mrb[0].mxu0 %v397
    %v437 = vpop.f32.mrb[0].mxu0
    %v438 = vadd.f32 %v388, %v437
    %v439 = vpop.f32.mrb[0].mxu0
    %v440 = vpop.f32.mrb[0].mxu0
    %v441 = vpop.f32.mrb[0].mxu0
    %442 = vdwg.mxu0
    %vm443 = vcmp.ge.f32.partialorder %v438, 0.0
    %v444 = vmul.f32 %v438, 0.01
    %v445 = vsel %vm443, %v438, %v444
    %v446 = vpack.c.bf16 %v445, %v445
    %v447 = vld [vmem:[%s8] sm:$0xf]
    %v448 = vld [vmem:[%s8 + $0x4] sm:$0xf]
    %v449 = vld [vmem:[%s8 + $0x8] sm:$0xf]
    %v450 = vld [vmem:[%s8 + $0xc] sm:$0xf]
    %v451 = vld [vmem:[%s8 + $0x10] sm:$0xf]
    %v452 = vld [vmem:[%s8 + $0x14] sm:$0xf]
    %v453 = vld [vmem:[%s8 + $0x18] sm:$0xf]
    %v454 = vld [vmem:[%s8 + $0x1c] sm:$0xf]
    %v455 = vld [vmem:[%s8 + $0x20] sm:$0xf]
    %v456 = vld [vmem:[%s8 + $0x24] sm:$0xf]
    %v457 = vld [vmem:[%s8 + $0x28] sm:$0xf]
    %v458 = vld [vmem:[%s8 + $0x2c] sm:$0xf]
    %v459 = vld [vmem:[%s8 + $0x30] sm:$0xf]
    %v460 = vld [vmem:[%s8 + $0x34] sm:$0xf]
    %v461 = vld [vmem:[%s8 + $0x38] sm:$0xf]
    %v462 = vld [vmem:[%s8 + $0x3c] sm:$0xf]
    %v463 = vld [vmem:[#allocation11] sm:$0x1]
    %v465 = vlaneseq
    %v466 = vshrl.u32 %v465, 7
    %v467 = vsub.s32 0, %v466
    %v468 = vrot.slane %v463, %v467
    %v486 = vunpack.c.l.b16 %v447
    %v487 = vunpack.c.l.b16 %v448
    %v488 = vunpack.c.l.b16 %v449
    %v489 = vunpack.c.l.b16 %v450
    %v490 = vunpack.c.l.b16 %v451
    %v491 = vunpack.c.l.b16 %v452
    %v492 = vunpack.c.l.b16 %v453
    %v493 = vunpack.c.l.b16 %v454
    %v494 = vunpack.c.l.b16 %v455
    %v495 = vunpack.c.l.b16 %v456
    %v496 = vunpack.c.l.b16 %v457
    %v497 = vunpack.c.l.b16 %v458
    %v498 = vunpack.c.l.b16 %v459
    %v499 = vunpack.c.l.b16 %v460
    %v500 = vunpack.c.l.b16 %v461
    %v501 = vunpack.c.l.b16 %v462
    %v502 = vpack.c.b16 %v487, %v486
    %v503 = vpack.c.b16 %v489, %v488
    %v504 = vpack.c.b16 %v491, %v490
    %v505 = vpack.c.b16 %v493, %v492
    %v506 = vpack.c.b16 %v495, %v494
    %v507 = vpack.c.b16 %v497, %v496
    %v508 = vpack.c.b16 %v499, %v498
    %v509 = vpack.c.b16 %v501, %v500
    %518 = vmatprep.subr.bf16.mxu0 0
    %519 = vmatpush1.bf16.msra.mxu0 %v502
    %520 = vmatprep.subr.bf16.mxu0 0
    %521 = vmatpush1.bf16.msra.mxu0 %v503
    %522 = vmatprep.subr.bf16.mxu0 0
    %523 = vmatpush1.bf16.msra.mxu0 %v504
    %524 = vmatprep.subr.bf16.mxu0 0
    %525 = vmatpush1.bf16.msra.mxu0 %v505
    %526 = vmatprep.subr.bf16.mxu0 0
    %527 = vmatpush1.bf16.msra.mxu0 %v506
    %528 = vmatprep.subr.bf16.mxu0 0
    %529 = vmatpush1.bf16.msra.mxu0 %v507
    %530 = vmatprep.subr.bf16.mxu0 0
    %531 = vmatpush1.bf16.msra.mxu0 %v508
    %532 = vmatprep.subr.bf16.mxu0 0
    %533 = vmatpush1.bf16.msra.mxu0 %v509
    %534 = vmatprep.subr.bf16.mxu0 0
    %535 = vmatpush1.bf16.msra.mxu0 0
    %536 = vmatprep.subr.bf16.mxu0 0
    %537 = vmatpush1.bf16.msra.mxu0 0
    %538 = vmatprep.subr.bf16.mxu0 0
    %539 = vmatpush1.bf16.msra.mxu0 0
    %540 = vmatprep.subr.bf16.mxu0 0
    %541 = vmatpush1.bf16.msra.mxu0 0
    %542 = vmatprep.subr.bf16.mxu0 0
    %543 = vmatpush1.bf16.msra.mxu0 0
    %544 = vmatprep.subr.bf16.mxu0 0
    %545 = vmatpush1.bf16.msra.mxu0 0
    %546 = vmatprep.subr.bf16.mxu0 0
    %547 = vmatpush1.bf16.msra.mxu0 0
    %548 = vmatprep.subr.bf16.mxu0 0
    %549 = vmatpush1.bf16.msra.mxu0 0
    %550 = vmatprep.mubr.bf16.mxu0 0
    %551 = vmatmul.mubr.bf16.gmra.mrb[0].mxu0 %v446
    %v552 = vpop.f32.mrb[0].mxu0
    %v553 = vadd.f32 %v468, %v552
    %v554 = vpop.f32.mrb[0].mxu0
    %v555 = vpop.f32.mrb[0].mxu0
    %v556 = vpop.f32.mrb[0].mxu0
    %557 = vdwg.mxu0
    %vm558 = vcmp.ge.f32.partialorder %v553, 0.0
    %v559 = vmul.f32 %v553, 0.01
    %v560 = vsel %vm558, %v553, %v559
    %v561 = vpack.c.bf16 %v560, %v560
    %v562 = vld [vmem:[#allocation13] sm:$0xff]
    %v563 = vld [vmem:[#allocation13 + $0x8] sm:$0xff]
    %v564 = vld [vmem:[#allocation13 + $0x10] sm:$0xff]
    %v565 = vld [vmem:[#allocation13 + $0x18] sm:$0xff]
    %v566 = vld [vmem:[#allocation13 + $0x20] sm:$0xff]
    %v567 = vld [vmem:[#allocation13 + $0x28] sm:$0xff]
    %v568 = vld [vmem:[#allocation13 + $0x30] sm:$0xff]
    %v569 = vld [vmem:[#allocation13 + $0x38] sm:$0xff]
    %v570 = vld [vmem:[#allocation13 + $0x40] sm:$0xff]
    %v571 = vld [vmem:[#allocation13 + $0x48] sm:$0xff]
    %v572 = vld [vmem:[#allocation13 + $0x50] sm:$0xff]
    %v573 = vld [vmem:[#allocation13 + $0x58] sm:$0xff]
    %v574 = vld [vmem:[#allocation13 + $0x60] sm:$0xff]
    %v575 = vld [vmem:[#allocation13 + $0x68] sm:$0xff]
    %v576 = vld [vmem:[#allocation13 + $0x70] sm:$0xff]
    %v577 = vld [vmem:[#allocation13 + $0x78] sm:$0xff]
    %v578 = vld [vmem:[#allocation13 + $0x80] sm:$0xff]
    %v579 = vld [vmem:[#allocation13 + $0x88] sm:$0xff]
    %v580 = vld [vmem:[#allocation13 + $0x90] sm:$0xff]
    %v581 = vld [vmem:[#allocation13 + $0x98] sm:$0xff]
    %v582 = vld [vmem:[#allocation13 + $0xa0] sm:$0xff]
    %v583 = vld [vmem:[#allocation13 + $0xa8] sm:$0xff]
    %v584 = vld [vmem:[#allocation13 + $0xb0] sm:$0xff]
    %v585 = vld [vmem:[#allocation13 + $0xb8] sm:$0xff]
    %v586 = vld [vmem:[#allocation13 + $0xc0] sm:$0xff]
    %v587 = vld [vmem:[#allocation13 + $0xc8] sm:$0xff]
    %v588 = vld [vmem:[#allocation13 + $0xd0] sm:$0xff]
    %v589 = vld [vmem:[#allocation13 + $0xd8] sm:$0xff]
    %v590 = vld [vmem:[#allocation13 + $0xe0] sm:$0xff]
    %v591 = vld [vmem:[#allocation13 + $0xe8] sm:$0xff]
    %v592 = vld [vmem:[#allocation13 + $0xf0] sm:$0xff]
    %v593 = vld [vmem:[#allocation13 + $0xf8] sm:$0xff]
    %v594 = vld [vmem:[#allocation13 + $0x100] sm:$0xff]
    %v595 = vld [vmem:[#allocation13 + $0x108] sm:$0xff]
    %v596 = vld [vmem:[#allocation13 + $0x110] sm:$0xff]
    %v597 = vld [vmem:[#allocation13 + $0x118] sm:$0xff]
    %v598 = vld [vmem:[#allocation13 + $0x120] sm:$0xff]
    %v599 = vld [vmem:[#allocation13 + $0x128] sm:$0xff]
    %v600 = vld [vmem:[#allocation13 + $0x130] sm:$0xff]
    %v601 = vld [vmem:[#allocation13 + $0x138] sm:$0xff]
    %v602 = vld [vmem:[#allocation13 + $0x140] sm:$0xff]
    %v603 = vld [vmem:[#allocation13 + $0x148] sm:$0xff]
    %v604 = vld [vmem:[#allocation13 + $0x150] sm:$0xff]
    %v605 = vld [vmem:[#allocation13 + $0x158] sm:$0xff]
    %v606 = vld [vmem:[#allocation13 + $0x160] sm:$0xff]
    %v607 = vld [vmem:[#allocation13 + $0x168] sm:$0xff]
    %v608 = vld [vmem:[#allocation13 + $0x170] sm:$0xff]
    %v609 = vld [vmem:[#allocation13 + $0x178] sm:$0xff]
    %v610 = vld [vmem:[#allocation14] sm:$0x3f]
    %v612 = vlaneseq
    %v613 = vshrl.u32 %v612, 7
    %v614 = vsub.s32 0, %v613
    %v615 = vrot.slane %v610, %v614
    %v616 = vlaneseq
    %v617 = vshrl.u32 %v616, 7
    %v618 = vsub.s32 1, %v617
    %v619 = vrot.slane %v610, %v618
    %v620 = vlaneseq
    %v621 = vshrl.u32 %v620, 7
    %v622 = vsub.s32 2, %v621
    %v623 = vrot.slane %v610, %v622
    %v624 = vlaneseq
    %v625 = vshrl.u32 %v624, 7
    %v626 = vsub.s32 3, %v625
    %v627 = vrot.slane %v610, %v626
    %v628 = vlaneseq
    %v629 = vshrl.u32 %v628, 7
    %v630 = vsub.s32 4, %v629
    %v631 = vrot.slane %v610, %v630
    %v632 = vlaneseq
    %v633 = vshrl.u32 %v632, 7
    %v634 = vsub.s32 5, %v633
    %v635 = vrot.slane %v610, %v634
    %v690 = vunpack.c.l.b16 %v562
    %v691 = vunpack.c.h.b16 %v562
    %v692 = vunpack.c.l.b16 %v563
    %v693 = vunpack.c.h.b16 %v563
    %v694 = vunpack.c.l.b16 %v564
    %v695 = vunpack.c.h.b16 %v564
    %v696 = vunpack.c.l.b16 %v565
    %v697 = vunpack.c.h.b16 %v565
    %v698 = vunpack.c.l.b16 %v566
    %v699 = vunpack.c.h.b16 %v566
    %v700 = vunpack.c.l.b16 %v567
    %v701 = vunpack.c.h.b16 %v567
    %v702 = vunpack.c.l.b16 %v568
    %v703 = vunpack.c.h.b16 %v568
    %v704 = vunpack.c.l.b16 %v569
    %v705 = vunpack.c.h.b16 %v569
    %v706 = vunpack.c.l.b16 %v570
    %v707 = vunpack.c.h.b16 %v570
    %v708 = vunpack.c.l.b16 %v571
    %v709 = vunpack.c.h.b16 %v571
    %v710 = vunpack.c.l.b16 %v572
    %v711 = vunpack.c.h.b16 %v572
    %v712 = vunpack.c.l.b16 %v573
    %v713 = vunpack.c.h.b16 %v573
    %v714 = vunpack.c.l.b16 %v574
    %v715 = vunpack.c.h.b16 %v574
    %v716 = vunpack.c.l.b16 %v575
    %v717 = vunpack.c.h.b16 %v575
    %v718 = vunpack.c.l.b16 %v576
    %v719 = vunpack.c.h.b16 %v576
    %v720 = vunpack.c.l.b16 %v577
    %v721 = vunpack.c.h.b16 %v577
    %v722 = vunpack.c.l.b16 %v578
    %v723 = vunpack.c.h.b16 %v578
    %v724 = vunpack.c.l.b16 %v579
    %v725 = vunpack.c.h.b16 %v579
    %v726 = vunpack.c.l.b16 %v580
    %v727 = vunpack.c.h.b16 %v580
    %v728 = vunpack.c.l.b16 %v581
    %v729 = vunpack.c.h.b16 %v581
    %v730 = vunpack.c.l.b16 %v582
    %v731 = vunpack.c.h.b16 %v582
    %v732 = vunpack.c.l.b16 %v583
    %v733 = vunpack.c.h.b16 %v583
    %v734 = vunpack.c.l.b16 %v584
    %v735 = vunpack.c.h.b16 %v584
    %v736 = vunpack.c.l.b16 %v585
    %v737 = vunpack.c.h.b16 %v585
    %v738 = vunpack.c.l.b16 %v586
    %v739 = vunpack.c.h.b16 %v586
    %v740 = vunpack.c.l.b16 %v587
    %v741 = vunpack.c.h.b16 %v587
    %v742 = vunpack.c.l.b16 %v588
    %v743 = vunpack.c.h.b16 %v588
    %v744 = vunpack.c.l.b16 %v589
    %v745 = vunpack.c.h.b16 %v589
    %v746 = vunpack.c.l.b16 %v590
    %v747 = vunpack.c.h.b16 %v590
    %v748 = vunpack.c.l.b16 %v591
    %v749 = vunpack.c.h.b16 %v591
    %v750 = vunpack.c.l.b16 %v592
    %v751 = vunpack.c.h.b16 %v592
    %v752 = vunpack.c.l.b16 %v593
    %v753 = vunpack.c.h.b16 %v593
    %v754 = vunpack.c.l.b16 %v594
    %v755 = vunpack.c.h.b16 %v594
    %v756 = vunpack.c.l.b16 %v595
    %v757 = vunpack.c.h.b16 %v595
    %v758 = vunpack.c.l.b16 %v596
    %v759 = vunpack.c.h.b16 %v596
    %v760 = vunpack.c.l.b16 %v597
    %v761 = vunpack.c.h.b16 %v597
    %v762 = vunpack.c.l.b16 %v598
    %v763 = vunpack.c.h.b16 %v598
    %v764 = vunpack.c.l.b16 %v599
    %v765 = vunpack.c.h.b16 %v599
    %v766 = vunpack.c.l.b16 %v600
    %v767 = vunpack.c.h.b16 %v600
    %v768 = vunpack.c.l.b16 %v601
    %v769 = vunpack.c.h.b16 %v601
    %v770 = vunpack.c.l.b16 %v602
    %v771 = vunpack.c.h.b16 %v602
    %v772 = vunpack.c.l.b16 %v603
    %v773 = vunpack.c.h.b16 %v603
    %v774 = vunpack.c.l.b16 %v604
    %v775 = vunpack.c.h.b16 %v604
    %v776 = vunpack.c.l.b16 %v605
    %v777 = vunpack.c.h.b16 %v605
    %v778 = vunpack.c.l.b16 %v606
    %v779 = vunpack.c.h.b16 %v606
    %v780 = vunpack.c.l.b16 %v607
    %v781 = vunpack.c.h.b16 %v607
    %v782 = vunpack.c.l.b16 %v608
    %v783 = vunpack.c.h.b16 %v608
    %v784 = vunpack.c.l.b16 %v609
    %v785 = vunpack.c.h.b16 %v609
    %v786 = vpack.c.b16 %v696, %v690
    %v787 = vpack.c.b16 %v697, %v691
    %v788 = vpack.c.b16 %v698, %v692
    %v789 = vpack.c.b16 %v699, %v693
    %v790 = vpack.c.b16 %v700, %v694
    %v791 = vpack.c.b16 %v701, %v695
    %v792 = vpack.c.b16 %v708, %v702
    %v793 = vpack.c.b16 %v709, %v703
    %v794 = vpack.c.b16 %v710, %v704
    %v795 = vpack.c.b16 %v711, %v705
    %v796 = vpack.c.b16 %v712, %v706
    %v797 = vpack.c.b16 %v713, %v707
    %v798 = vpack.c.b16 %v720, %v714
    %v799 = vpack.c.b16 %v721, %v715
    %v800 = vpack.c.b16 %v722, %v716
    %v801 = vpack.c.b16 %v723, %v717
    %v802 = vpack.c.b16 %v724, %v718
    %v803 = vpack.c.b16 %v725, %v719
    %v804 = vpack.c.b16 %v732, %v726
    %v805 = vpack.c.b16 %v733, %v727
    %v806 = vpack.c.b16 %v734, %v728
    %v807 = vpack.c.b16 %v735, %v729
    %v808 = vpack.c.b16 %v736, %v730
    %v809 = vpack.c.b16 %v737, %v731
    %v810 = vpack.c.b16 %v744, %v738
    %v811 = vpack.c.b16 %v745, %v739
    %v812 = vpack.c.b16 %v746, %v740
    %v813 = vpack.c.b16 %v747, %v741
    %v814 = vpack.c.b16 %v748, %v742
    %v815 = vpack.c.b16 %v749, %v743
    %v816 = vpack.c.b16 %v756, %v750
    %v817 = vpack.c.b16 %v757, %v751
    %v818 = vpack.c.b16 %v758, %v752
    %v819 = vpack.c.b16 %v759, %v753
    %v820 = vpack.c.b16 %v760, %v754
    %v821 = vpack.c.b16 %v761, %v755
    %v822 = vpack.c.b16 %v768, %v762
    %v823 = vpack.c.b16 %v769, %v763
    %v824 = vpack.c.b16 %v770, %v764
    %v825 = vpack.c.b16 %v771, %v765
    %v826 = vpack.c.b16 %v772, %v766
    %v827 = vpack.c.b16 %v773, %v767
    %v828 = vpack.c.b16 %v780, %v774
    %v829 = vpack.c.b16 %v781, %v775
    %v830 = vpack.c.b16 %v782, %v776
    %v831 = vpack.c.b16 %v783, %v777
    %v832 = vpack.c.b16 %v784, %v778
    %v833 = vpack.c.b16 %v785, %v779
    %882 = vmatprep.subr.bf16.mxu0 %v787
    %883 = vmatpush1.bf16.msra.mxu0 %v786
    %884 = vmatprep.subr.bf16.mxu0 %v793
    %885 = vmatpush1.bf16.msra.mxu0 %v792
    %886 = vmatprep.subr.bf16.mxu0 %v799
    %887 = vmatpush1.bf16.msra.mxu0 %v798
    %888 = vmatprep.subr.bf16.mxu0 %v805
    %889 = vmatpush1.bf16.msra.mxu0 %v804
    %890 = vmatprep.subr.bf16.mxu0 %v811
    %891 = vmatpush1.bf16.msra.mxu0 %v810
    %892 = vmatprep.subr.bf16.mxu0 %v817
    %893 = vmatpush1.bf16.msra.mxu0 %v816
    %894 = vmatprep.subr.bf16.mxu0 %v823
    %895 = vmatpush1.bf16.msra.mxu0 %v822
    %896 = vmatprep.subr.bf16.mxu0 %v829
    %897 = vmatpush1.bf16.msra.mxu0 %v828
    %898 = vmatprep.subr.bf16.mxu0 0
    %899 = vmatpush1.bf16.msra.mxu0 0
    %900 = vmatprep.subr.bf16.mxu0 0
    %901 = vmatpush1.bf16.msra.mxu0 0
    %902 = vmatprep.subr.bf16.mxu0 0
    %903 = vmatpush1.bf16.msra.mxu0 0
    %904 = vmatprep.subr.bf16.mxu0 0
    %905 = vmatpush1.bf16.msra.mxu0 0
    %906 = vmatprep.subr.bf16.mxu0 0
    %907 = vmatpush1.bf16.msra.mxu0 0
    %908 = vmatprep.subr.bf16.mxu0 0
    %909 = vmatpush1.bf16.msra.mxu0 0
    %910 = vmatprep.subr.bf16.mxu0 0
    %911 = vmatpush1.bf16.msra.mxu0 0
    %912 = vmatprep.subr.bf16.mxu0 0
    %913 = vmatpush1.bf16.msra.mxu0 0
    %914 = vmatprep.mubr.bf16.mxu0 0
    %915 = vmatmul.mubr.bf16.gmra.mrb[0].mxu0 %v561
    %v916 = vpop.f32.mrb[0].mxu0
    %v917 = vadd.f32 %v615, %v916
    %v918 = vpop.f32.mrb[0].mxu0
    %v919 = vadd.f32 %v619, %v918
    %v920 = vpop.f32.mrb[0].mxu0
    %v921 = vpop.f32.mrb[0].mxu0
    %922 = vdwg.mxu0
    %923 = vmatprep.subr.bf16.mxu0 %v789
    %924 = vmatpush1.bf16.msra.mxu0 %v788
    %925 = vmatprep.subr.bf16.mxu0 %v795
    %926 = vmatpush1.bf16.msra.mxu0 %v794
    %927 = vmatprep.subr.bf16.mxu0 %v801
    %928 = vmatpush1.bf16.msra.mxu0 %v800
    %929 = vmatprep.subr.bf16.mxu0 %v807
    %930 = vmatpush1.bf16.msra.mxu0 %v806
    %931 = vmatprep.subr.bf16.mxu0 %v813
    %932 = vmatpush1.bf16.msra.mxu0 %v812
    %933 = vmatprep.subr.bf16.mxu0 %v819
    %934 = vmatpush1.bf16.msra.mxu0 %v818
    %935 = vmatprep.subr.bf16.mxu0 %v825
    %936 = vmatpush1.bf16.msra.mxu0 %v824
    %937 = vmatprep.subr.bf16.mxu0 %v831
    %938 = vmatpush1.bf16.msra.mxu0 %v830
    %939 = vmatprep.subr.bf16.mxu0 0
    %940 = vmatpush1.bf16.msra.mxu0 0
    %941 = vmatprep.subr.bf16.mxu0 0
    %942 = vmatpush1.bf16.msra.mxu0 0
    %943 = vmatprep.subr.bf16.mxu0 0
    %944 = vmatpush1.bf16.msra.mxu0 0
    %945 = vmatprep.subr.bf16.mxu0 0
    %946 = vmatpush1.bf16.msra.mxu0 0
    %947 = vmatprep.subr.bf16.mxu0 0
    %948 = vmatpush1.bf16.msra.mxu0 0
    %949 = vmatprep.subr.bf16.mxu0 0
    %950 = vmatpush1.bf16.msra.mxu0 0
    %951 = vmatprep.subr.bf16.mxu0 0
    %952 = vmatpush1.bf16.msra.mxu0 0
    %953 = vmatprep.subr.bf16.mxu0 0
    %954 = vmatpush1.bf16.msra.mxu0 0
    %955 = vmatprep.mubr.bf16.mxu0 0
    %956 = vmatmul.mubr.bf16.gmra.mrb[0].mxu0 %v561
    %v957 = vpop.f32.mrb[0].mxu0
    %v958 = vadd.f32 %v623, %v957
    %v959 = vpop.f32.mrb[0].mxu0
    %v960 = vadd.f32 %v627, %v959
    %v961 = vpop.f32.mrb[0].mxu0
    %v962 = vpop.f32.mrb[0].mxu0
    %963 = vdwg.mxu0
    %964 = vmatprep.subr.bf16.mxu0 %v791
    %965 = vmatpush1.bf16.msra.mxu0 %v790
    %966 = vmatprep.subr.bf16.mxu0 %v797
    %967 = vmatpush1.bf16.msra.mxu0 %v796
    %968 = vmatprep.subr.bf16.mxu0 %v803
    %969 = vmatpush1.bf16.msra.mxu0 %v802
    %970 = vmatprep.subr.bf16.mxu0 %v809
    %971 = vmatpush1.bf16.msra.mxu0 %v808
    %972 = vmatprep.subr.bf16.mxu0 %v815
    %973 = vmatpush1.bf16.msra.mxu0 %v814
    %974 = vmatprep.subr.bf16.mxu0 %v821
    %975 = vmatpush1.bf16.msra.mxu0 %v820
    %976 = vmatprep.subr.bf16.mxu0 %v827
    %977 = vmatpush1.bf16.msra.mxu0 %v826
    %978 = vmatprep.subr.bf16.mxu0 %v833
    %979 = vmatpush1.bf16.msra.mxu0 %v832
    %980 = vmatprep.subr.bf16.mxu0 0
    %981 = vmatpush1.bf16.msra.mxu0 0
    %982 = vmatprep.subr.bf16.mxu0 0
    %983 = vmatpush1.bf16.msra.mxu0 0
    %984 = vmatprep.subr.bf16.mxu0 0
    %985 = vmatpush1.bf16.msra.mxu0 0
    %986 = vmatprep.subr.bf16.mxu0 0
    %987 = vmatpush1.bf16.msra.mxu0 0
    %988 = vmatprep.subr.bf16.mxu0 0
    %989 = vmatpush1.bf16.msra.mxu0 0
    %990 = vmatprep.subr.bf16.mxu0 0
    %991 = vmatpush1.bf16.msra.mxu0 0
    %992 = vmatprep.subr.bf16.mxu0 0
    %993 = vmatpush1.bf16.msra.mxu0 0
    %994 = vmatprep.subr.bf16.mxu0 0
    %995 = vmatpush1.bf16.msra.mxu0 0
    %996 = vmatprep.mubr.bf16.mxu0 0
    %997 = vmatmul.mubr.bf16.gmra.mrb[0].mxu0 %v561
    %v998 = vpop.f32.mrb[0].mxu0
    %v999 = vadd.f32 %v631, %v998
    %v1000 = vpop.f32.mrb[0].mxu0
    %v1001 = vadd.f32 %v635, %v1000
    %v1002 = vpop.f32.mrb[0].mxu0
    %v1003 = vpop.f32.mrb[0].mxu0
    %1004 = vdwg.mxu0
    %v1005 = vmul.f32 %v917, %v917
    %v1006 = vmul.f32 %v958, %v958
    %v1007 = vadd.f32 %v1005, %v1006
    %v1008 = vmul.f32 %v999, %v999
    %v1009 = vadd.f32 %v1007, %v1008
    %v1010 = vmax.f32 %v1009, 1e-24
    %v1011 = vrsqrt.pop %v1010
    %v1012 = vmul.f32 %v917, %v1011
    %v1013 = vmul.f32 %v958, %v1011
    %v1014 = vmul.f32 %v999, %v1011
    %v1015 = vmul.f32 %v1012, %v919
    %v1016 = vmul.f32 %v1013, %v960
    %v1017 = vadd.f32 %v1015, %v1016
    %v1018 = vmul.f32 %v1014, %v1001
    %v1019 = vadd.f32 %v1017, %v1018
    %v1020 = vmul.f32 %v1019, %v1012
    %v1021 = vsub.f32 %v919, %v1020
    %v1022 = vmul.f32 %v1019, %v1013
    %v1023 = vsub.f32 %v960, %v1022
    %v1024 = vmul.f32 %v1019, %v1014
    %v1025 = vsub.f32 %v1001, %v1024
    %v1026 = vmul.f32 %v1021, %v1021
    %v1027 = vmul.f32 %v1023, %v1023
    %v1028 = vadd.f32 %v1026, %v1027
    %v1029 = vmul.f32 %v1025, %v1025
    %v1030 = vadd.f32 %v1028, %v1029
    %v1031 = vmax.f32 %v1030, 1e-24
    %v1032 = vrsqrt.pop %v1031
    %v1033 = vmul.f32 %v1021, %v1032
    %v1034 = vmul.f32 %v1023, %v1032
    %v1035 = vmul.f32 %v1025, %v1032
    %v1036 = vmul.f32 %v1013, %v1035
    %v1037 = vmul.f32 %v1014, %v1034
    %v1038 = vsub.f32 %v1036, %v1037
    %v1039 = vmul.f32 %v1014, %v1033
    %v1040 = vmul.f32 %v1012, %v1035
    %v1041 = vsub.f32 %v1039, %v1040
    %v1042 = vmul.f32 %v1012, %v1034
    %v1043 = vmul.f32 %v1013, %v1033
    %v1044 = vsub.f32 %v1042, %v1043
    %v1045 = vadd.f32 %v1012, 1.0
    %v1046 = vsub.f32 %v1045, %v1034
    %v1047 = vsub.f32 %v1046, %v1044
    %v1048 = vsub.f32 1.0, %v1012
    %v1049 = vadd.f32 %v1048, %v1034
    %v1050 = vsub.f32 %v1049, %v1044
    %v1051 = vsub.f32 %v1048, %v1034
    %v1052 = vadd.f32 %v1051, %v1044
    %v1053 = vadd.f32 %v1045, %v1034
    %v1054 = vadd.f32 %v1053, %v1044
    %v1055 = vsub.f32 %v1035, %v1041
    %v1056 = vsub.f32 %v1038, %v1014
    %v1057 = vsub.f32 %v1013, %v1033
    %v1058 = vadd.f32 %v1013, %v1033
    %v1059 = vadd.f32 %v1035, %v1041
    %v1060 = vadd.f32 %v1038, %v1014
    %vm1061 = vcmp.lt.f32.partialorder %v1044, 1e-06
    %vm1062 = vcmp.gt.f32.partialorder %v1012, %v1034
    %v1063 = vsub.f32 0.0, %v1034
    %vm1064 = vcmp.lt.f32.partialorder %v1012, %v1063
    %v1065 = vsel %vm1062, %v1055, %v1056
    %v1066 = vsel %vm1064, %v1057, %v1054
    %v1067 = vsel %vm1061, %v1065, %v1066
    %v1068 = vsel %vm1062, %v1047, %v1058
    %v1069 = vsel %vm1064, %v1060, %v1055
    %v1070 = vsel %vm1061, %v1068, %v1069
    %v1071 = vsel %vm1062, %v1058, %v1050
    %v1072 = vsel %vm1064, %v1059, %v1056
    %v1073 = vsel %vm1061, %v1071, %v1072
    %v1074 = vsel %vm1062, %v1060, %v1059
    %v1075 = vsel %vm1064, %v1052, %v1057
    %v1076 = vsel %vm1061, %v1074, %v1075
    %v1077 = vsel %vm1062, %v1047, %v1050
    %v1078 = vsel %vm1064, %v1052, %v1054
    %v1079 = vsel %vm1061, %v1077, %v1078
    %v1080 = vrsqrt.pop %v1079
    %v1081 = vmul.f32 %v1080, 0.5
    %v1082 = vmul.f32 %v1067, %v1081
    %v1083 = vmul.f32 %v1070, %v1081
    %v1084 = vmul.f32 %v1073, %v1081
    %v1085 = vmul.f32 %v1076, %v1081
    %v1086 = vmul.f32 %v1083, %v1083
    %v1087 = vmul.f32 %v1084, %v1084
    %v1088 = vadd.f32 %v1086, %v1087
    %v1089 = vmul.f32 %v1085, %v1085
    %v1090 = vadd.f32 %v1088, %v1089
    %v1091 = vrsqrt.pop %v1090
    %v1092 = vmul.f32 %v1090, %v1091
    %vm1093 = vcmp.eq.f32.partialorder %v1090, inf
    %v1094 = vsel %vm1093, %v1090, %v1092
    %vm1095 = vcmp.eq.f32.partialorder %v1090, 0.0
    %v1096 = vand.u32 %v1090, 2147483648
    %v1097 = vsel %vm1095, %v1096, %v1094
    %vm1098 = vcmp.lt.f32.partialorder %v1082, 0.0
    %v1099 = vsub.f32 0.0, %v1097
    %v1100 = vsub.f32 0.0, %v1082
    %v1101 = vand.u32 2147483647, %v1100
    %v1102 = vand.u32 2147483647, %v1099
    %v1103 = vmin.f32 %v1101, %v1102
    %v1104 = vmax.f32 %v1101, %v1102
    %v1105 = vrcp.pop %v1104
    %v1106 = vmul.f32 %v1103, %v1105
    %v1107 = vmul.f32 %v1106, %v1106
    %v1108 = vmul.f32 0.002785687, %v1107
    %v1109 = vadd.f32 %v1108, -0.015866
    %v1110 = vmul.f32 %v1109, %v1107
    %v1111 = vadd.f32 %v1110, 0.04247222
    %v1112 = vmul.f32 %v1111, %v1107
    %v1113 = vadd.f32 %v1112, -0.074975304
    %v1114 = vmul.f32 %v1113, %v1107
    %v1115 = vadd.f32 %v1114, 0.1064488
    %v1116 = vmul.f32 %v1115, %v1107
    %v1117 = vadd.f32 %v1116, -0.14207031
    %v1118 = vmul.f32 %v1117, %v1107
    %v1119 = vadd.f32 %v1118, 0.19993454
    %v1120 = vmul.f32 %v1119, %v1107
    %v1121 = vadd.f32 %v1120, -0.33333147
    %v1122 = vmul.f32 %v1121, %v1107
    %v1123 = vmul.f32 %v1122, %v1106
    %v1124 = vadd.f32 %v1123, %v1106
    %vm1125 = vcmp.gt.f32.partialorder %v1102, %v1101
    %v1126 = vsub.f32 1.5707964, %v1124
    %v1127 = vsel %vm1125, %v1126, %v1124
    %vm1128 = vcmp.lt.f32.partialorder %v1100, 0.0
    %v1129 = vsub.f32 3.1415927, %v1127
    %v1130 = vsel %vm1128, %v1129, %v1127
    %vm1131 = vcmp.lt.s32.totalorder %v1100, 0
    %v1132 = vsel %vm1131, 3.1415927, 0.0
    %vm1133 = vcmp.eq.f32.partialorder %v1099, 0.0
    %v1134 = vsel %vm1133, %v1132, %v1130
    %vm1135 = vcmp.ne.f32.partialorder %v1100, %v1100
    %vm1136 = vcmp.ne.f32.partialorder %v1099, %v1099
    %vm1137 = vmor %vm1135, %vm1136
    %v1138 = vsel %vm1137, nan, %v1134
    %vm1139 = vcmp.lt.f32.partialorder %v1100, 0.0
    %v1140 = vsel %vm1139, 2.3561945, 0.7853982
    %vm1141 = vcmp.eq.s32.totalorder %v1101, inf
    %vm1142 = vcmp.eq.s32.totalorder %v1102, inf
    %vm1143 = vmand %vm1141, %vm1142
    %v1144 = vsel %vm1143, %v1140, %v1138
    %v1145 = vand.u32 2147483647, %v1144
    %v1146 = vand.u32 %v1099, 2147483648
    %v1147 = vor.u32 %v1145, %v1146
    %v1148 = vand.u32 2147483647, %v1082
    %v1149 = vand.u32 2147483647, %v1097
    %v1150 = vmin.f32 %v1148, %v1149
    %v1151 = vmax.f32 %v1148, %v1149
    %v1152 = vrcp.pop %v1151
    %v1153 = vmul.f32 %v1150, %v1152
    %v1154 = vmul.f32 %v1153, %v1153
    %v1155 = vmul.f32 0.002785687, %v1154
    %v1156 = vadd.f32 %v1155, -0.015866
    %v1157 = vmul.f32 %v1156, %v1154
    %v1158 = vadd.f32 %v1157, 0.04247222
    %v1159 = vmul.f32 %v1158, %v1154
    %v1160 = vadd.f32 %v1159, -0.074975304
    %v1161 = vmul.f32 %v1160, %v1154
    %v1162 = vadd.f32 %v1161, 0.1064488
    %v1163 = vmul.f32 %v1162, %v1154
    %v1164 = vadd.f32 %v1163, -0.14207031
    %v1165 = vmul.f32 %v1164, %v1154
    %v1166 = vadd.f32 %v1165, 0.19993454
    %v1167 = vmul.f32 %v1166, %v1154
    %v1168 = vadd.f32 %v1167, -0.33333147
    %v1169 = vmul.f32 %v1168, %v1154
    %v1170 = vmul.f32 %v1169, %v1153
    %v1171 = vadd.f32 %v1170, %v1153
    %vm1172 = vcmp.gt.f32.partialorder %v1149, %v1148
    %v1173 = vsub.f32 1.5707964, %v1171
    %v1174 = vsel %vm1172, %v1173, %v1171
    %vm1175 = vcmp.lt.f32.partialorder %v1082, 0.0
    %v1176 = vsub.f32 3.1415927, %v1174
    %v1177 = vsel %vm1175, %v1176, %v1174
    %vm1178 = vcmp.lt.s32.totalorder %v1082, 0
    %v1179 = vsel %vm1178, 3.1415927, 0.0
    %vm1180 = vcmp.eq.f32.partialorder %v1097, 0.0
    %v1181 = vsel %vm1180, %v1179, %v1177
    %vm1182 = vcmp.ne.f32.partialorder %v1082, %v1082
    %vm1183 = vcmp.ne.f32.partialorder %v1097, %v1097
    %vm1184 = vmor %vm1182, %vm1183
    %v1185 = vsel %vm1184, nan, %v1181
    %vm1186 = vcmp.lt.f32.partialorder %v1082, 0.0
    %v1187 = vsel %vm1186, 2.3561945, 0.7853982
    %vm1188 = vcmp.eq.s32.totalorder %v1148, inf
    %vm1189 = vcmp.eq.s32.totalorder %v1149, inf
    %vm1190 = vmand %vm1188, %vm1189
    %v1191 = vsel %vm1190, %v1187, %v1185
    %v1192 = vand.u32 2147483647, %v1191
    %v1193 = vand.u32 %v1097, 2147483648
    %v1194 = vor.u32 %v1192, %v1193
    %v1195 = vsel %vm1098, %v1147, %v1194
    %v1196 = vmul.f32 %v1195, 2.0
    %vm1197 = vcmp.gt.f32.partialorder %v1090, 0.0
    %v1198 = vrcp.pop %v1097
    %v1199 = vmul.f32 %v1196, %v1198
    %v1200 = vsel %vm1197, %v1199, 2.0
    %v1201 = vmul.f32 %v1083, %v1200
    %v1202 = vmul.f32 %v1084, %v1200
    %v1203 = vmul.f32 %v1085, %v1200
    %v1204 = vld [vmem:[%s12] sm:$0xff]
    %v1205 = vld [vmem:[%s12 + $0x8] sm:$0xff]
    %v1206 = vld [vmem:[%s13] sm:$0xff]
    %v1207 = vld [vmem:[%s13 + $0x8] sm:$0xff]
    %vm1208 = vcmask 130048
    %v1210 = vsel %vm1208, %v1202, 0
    %1212 = vmatprep.subr.mxu0 0.0
    %1213 = vmatpush1.msra.mxu0 %v1206
    %1214 = vmatprep.subr.mxu0 0.0
    %1215 = vmatpush1.msra.mxu0 %v1207
    %1216 = vmatprep.subr.mxu0 0.0
    %1217 = vmatpush1.msra.mxu0 0.0
    %1218 = vmatprep.subr.mxu0 0.0
    %1219 = vmatpush1.msra.mxu0 0.0
    %1220 = vmatprep.subr.mxu0 0.0
    %1221 = vmatpush1.msra.mxu0 0.0
    %1222 = vmatprep.subr.mxu0 0.0
    %1223 = vmatpush1.msra.mxu0 0.0
    %1224 = vmatprep.subr.mxu0 0.0
    %1225 = vmatpush1.msra.mxu0 0.0
    %1226 = vmatprep.subr.mxu0 0.0
    %1227 = vmatpush1.msra.mxu0 0.0
    %1228 = vmatprep.subr.mxu0 0.0
    %1229 = vmatpush1.msra.mxu0 0.0
    %1230 = vmatprep.subr.mxu0 0.0
    %1231 = vmatpush1.msra.mxu0 0.0
    %1232 = vmatprep.subr.mxu0 0.0
    %1233 = vmatpush1.msra.mxu0 0.0
    %1234 = vmatprep.subr.mxu0 0.0
    %1235 = vmatpush1.msra.mxu0 0.0
    %1236 = vmatprep.subr.mxu0 0.0
    %1237 = vmatpush1.msra.mxu0 0.0
    %1238 = vmatprep.subr.mxu0 0.0
    %1239 = vmatpush1.msra.mxu0 0.0
    %1240 = vmatprep.subr.mxu0 0.0
    %1241 = vmatpush1.msra.mxu0 0.0
    %1242 = vmatprep.subr.mxu0 0.0
    %1243 = vmatpush1.msra.mxu0 0.0
    %1244 = vmatprep.subr.mxu0 0.0
    %1245 = vmatpush1.msra.mxu0 0.0
    %1246 = vmatprep.subr.mxu0 0.0
    %1247 = vmatpush1.msra.mxu0 0.0
    %1248 = vmatprep.subr.mxu0 0.0
    %1249 = vmatpush1.msra.mxu0 0.0
    %1250 = vmatprep.subr.mxu0 0.0
    %1251 = vmatpush1.msra.mxu0 0.0
    %1252 = vmatprep.subr.mxu0 0.0
    %1253 = vmatpush1.msra.mxu0 0.0
    %1254 = vmatprep.subr.mxu0 0.0
    %1255 = vmatpush1.msra.mxu0 0.0
    %1256 = vmatprep.subr.mxu0 0.0
    %1257 = vmatpush1.msra.mxu0 0.0
    %1258 = vmatprep.subr.mxu0 0.0
    %1259 = vmatpush1.msra.mxu0 0.0
    %1260 = vmatprep.subr.mxu0 0.0
    %1261 = vmatpush1.msra.mxu0 0.0
    %1262 = vmatprep.subr.mxu0 0.0
    %1263 = vmatpush1.msra.mxu0 0.0
    %1264 = vmatprep.subr.mxu0 0.0
    %1265 = vmatpush1.msra.mxu0 0.0
    %1266 = vmatprep.subr.mxu0 0.0
    %1267 = vmatpush1.msra.mxu0 0.0
    %1268 = vmatprep.subr.mxu0 0.0
    %1269 = vmatpush1.msra.mxu0 0.0
    %1270 = vmatprep.subr.mxu0 0.0
    %1271 = vmatpush1.msra.mxu0 0.0
    %1272 = vmatprep.subr.mxu0 0.0
    %1273 = vmatpush1.msra.mxu0 0.0
    %1274 = vmatprep.subr.mxu0 0.0
    %1275 = vmatpush1.msra.mxu0 0.0
    %1276 = vmatprep.mubr.f32.mxu0 0.0
    %1277 = vmatmul.mubr.f32.gmra.mrb[0].mxu0 %v1210
    %v1278 = vpop.f32.mrb[0].mxu0
    %v1279 = vadd.f32 0.0, %v1278
    %v1280 = vpop.f32.mrb[0].mxu0
    %1281 = vdwg.mxu0
    %v1283 = vsel %vm1208, %v1201, 0
    %1285 = vmatprep.subr.mxu0 0.0
    %1286 = vmatpush1.msra.mxu0 %v1204
    %1287 = vmatprep.subr.mxu0 0.0
    %1288 = vmatpush1.msra.mxu0 %v1205
    %1289 = vmatprep.subr.mxu0 0.0
    %1290 = vmatpush1.msra.mxu0 0.0
    %1291 = vmatprep.subr.mxu0 0.0
    %1292 = vmatpush1.msra.mxu0 0.0
    %1293 = vmatprep.subr.mxu0 0.0
    %1294 = vmatpush1.msra.mxu0 0.0
    %1295 = vmatprep.subr.mxu0 0.0
    %1296 = vmatpush1.msra.mxu0 0.0
    %1297 = vmatprep.subr.mxu0 0.0
    %1298 = vmatpush1.msra.mxu0 0.0
    %1299 = vmatprep.subr.mxu0 0.0
    %1300 = vmatpush1.msra.mxu0 0.0
    %1301 = vmatprep.subr.mxu0 0.0
    %1302 = vmatpush1.msra.mxu0 0.0
    %1303 = vmatprep.subr.mxu0 0.0
    %1304 = vmatpush1.msra.mxu0 0.0
    %1305 = vmatprep.subr.mxu0 0.0
    %1306 = vmatpush1.msra.mxu0 0.0
    %1307 = vmatprep.subr.mxu0 0.0
    %1308 = vmatpush1.msra.mxu0 0.0
    %1309 = vmatprep.subr.mxu0 0.0
    %1310 = vmatpush1.msra.mxu0 0.0
    %1311 = vmatprep.subr.mxu0 0.0
    %1312 = vmatpush1.msra.mxu0 0.0
    %1313 = vmatprep.subr.mxu0 0.0
    %1314 = vmatpush1.msra.mxu0 0.0
    %1315 = vmatprep.subr.mxu0 0.0
    %1316 = vmatpush1.msra.mxu0 0.0
    %1317 = vmatprep.subr.mxu0 0.0
    %1318 = vmatpush1.msra.mxu0 0.0
    %1319 = vmatprep.subr.mxu0 0.0
    %1320 = vmatpush1.msra.mxu0 0.0
    %1321 = vmatprep.subr.mxu0 0.0
    %1322 = vmatpush1.msra.mxu0 0.0
    %1323 = vmatprep.subr.mxu0 0.0
    %1324 = vmatpush1.msra.mxu0 0.0
    %1325 = vmatprep.subr.mxu0 0.0
    %1326 = vmatpush1.msra.mxu0 0.0
    %1327 = vmatprep.subr.mxu0 0.0
    %1328 = vmatpush1.msra.mxu0 0.0
    %1329 = vmatprep.subr.mxu0 0.0
    %1330 = vmatpush1.msra.mxu0 0.0
    %1331 = vmatprep.subr.mxu0 0.0
    %1332 = vmatpush1.msra.mxu0 0.0
    %1333 = vmatprep.subr.mxu0 0.0
    %1334 = vmatpush1.msra.mxu0 0.0
    %1335 = vmatprep.subr.mxu0 0.0
    %1336 = vmatpush1.msra.mxu0 0.0
    %1337 = vmatprep.subr.mxu0 0.0
    %1338 = vmatpush1.msra.mxu0 0.0
    %1339 = vmatprep.subr.mxu0 0.0
    %1340 = vmatpush1.msra.mxu0 0.0
    %1341 = vmatprep.subr.mxu0 0.0
    %1342 = vmatpush1.msra.mxu0 0.0
    %1343 = vmatprep.subr.mxu0 0.0
    %1344 = vmatpush1.msra.mxu0 0.0
    %1345 = vmatprep.subr.mxu0 0.0
    %1346 = vmatpush1.msra.mxu0 0.0
    %1347 = vmatprep.subr.mxu0 0.0
    %1348 = vmatpush1.msra.mxu0 0.0
    %1349 = vmatprep.mubr.f32.mxu0 0.0
    %1350 = vmatmul.mubr.f32.gmra.mrb[0].mxu0 %v1283
    %v1351 = vpop.f32.mrb[0].mxu0
    %v1352 = vadd.f32 %v1279, %v1351
    %v1353 = vpop.f32.mrb[0].mxu0
    %1354 = vdwg.mxu0
    %v1355 = vld [vmem:[#allocation16] sm:$0xff]
    %v1356 = vld [vmem:[#allocation16 + $0x8] sm:$0xff]
    %v1358 = vsel %vm1208, %v1203, 0
    %1360 = vmatprep.subr.mxu0 0.0
    %1361 = vmatpush1.msra.mxu0 %v1355
    %1362 = vmatprep.subr.mxu0 0.0
    %1363 = vmatpush1.msra.mxu0 %v1356
    %1364 = vmatprep.subr.mxu0 0.0
    %1365 = vmatpush1.msra.mxu0 0.0
    %1366 = vmatprep.subr.mxu0 0.0
    %1367 = vmatpush1.msra.mxu0 0.0
    %1368 = vmatprep.subr.mxu0 0.0
    %1369 = vmatpush1.msra.mxu0 0.0
    %1370 = vmatprep.subr.mxu0 0.0
    %1371 = vmatpush1.msra.mxu0 0.0
    %1372 = vmatprep.subr.mxu0 0.0
    %1373 = vmatpush1.msra.mxu0 0.0
    %1374 = vmatprep.subr.mxu0 0.0
    %1375 = vmatpush1.msra.mxu0 0.0
    %1376 = vmatprep.subr.mxu0 0.0
    %1377 = vmatpush1.msra.mxu0 0.0
    %1378 = vmatprep.subr.mxu0 0.0
    %1379 = vmatpush1.msra.mxu0 0.0
    %1380 = vmatprep.subr.mxu0 0.0
    %1381 = vmatpush1.msra.mxu0 0.0
    %1382 = vmatprep.subr.mxu0 0.0
    %1383 = vmatpush1.msra.mxu0 0.0
    %1384 = vmatprep.subr.mxu0 0.0
    %1385 = vmatpush1.msra.mxu0 0.0
    %1386 = vmatprep.subr.mxu0 0.0
    %1387 = vmatpush1.msra.mxu0 0.0
    %1388 = vmatprep.subr.mxu0 0.0
    %1389 = vmatpush1.msra.mxu0 0.0
    %1390 = vmatprep.subr.mxu0 0.0
    %1391 = vmatpush1.msra.mxu0 0.0
    %1392 = vmatprep.subr.mxu0 0.0
    %1393 = vmatpush1.msra.mxu0 0.0
    %1394 = vmatprep.subr.mxu0 0.0
    %1395 = vmatpush1.msra.mxu0 0.0
    %1396 = vmatprep.subr.mxu0 0.0
    %1397 = vmatpush1.msra.mxu0 0.0
    %1398 = vmatprep.subr.mxu0 0.0
    %1399 = vmatpush1.msra.mxu0 0.0
    %1400 = vmatprep.subr.mxu0 0.0
    %1401 = vmatpush1.msra.mxu0 0.0
    %1402 = vmatprep.subr.mxu0 0.0
    %1403 = vmatpush1.msra.mxu0 0.0
    %1404 = vmatprep.subr.mxu0 0.0
    %1405 = vmatpush1.msra.mxu0 0.0
    %1406 = vmatprep.subr.mxu0 0.0
    %1407 = vmatpush1.msra.mxu0 0.0
    %1408 = vmatprep.subr.mxu0 0.0
    %1409 = vmatpush1.msra.mxu0 0.0
    %1410 = vmatprep.subr.mxu0 0.0
    %1411 = vmatpush1.msra.mxu0 0.0
    %1412 = vmatprep.subr.mxu0 0.0
    %1413 = vmatpush1.msra.mxu0 0.0
    %1414 = vmatprep.subr.mxu0 0.0
    %1415 = vmatpush1.msra.mxu0 0.0
    %1416 = vmatprep.subr.mxu0 0.0
    %1417 = vmatpush1.msra.mxu0 0.0
    %1418 = vmatprep.subr.mxu0 0.0
    %1419 = vmatpush1.msra.mxu0 0.0
    %1420 = vmatprep.subr.mxu0 0.0
    %1421 = vmatpush1.msra.mxu0 0.0
    %1422 = vmatprep.subr.mxu0 0.0
    %1423 = vmatpush1.msra.mxu0 0.0
    %1424 = vmatprep.mubr.f32.mxu0 0.0
    %1425 = vmatmul.mubr.f32.gmra.mrb[0].mxu0 %v1358
    %v1426 = vpop.f32.mrb[0].mxu0
    %v1427 = vadd.f32 0.0, %v1426
    %v1428 = vpop.f32.mrb[0].mxu0
    %1429 = vdwg.mxu0
    %v1430 = vadd.f32 %v1352, %v1427
    %1431 = vst [vmem:[#allocation17] sm:$0xff] %v1430
    // Predicated region
    $region98: #{tpu_custom_call.1} parent=1 // pred_check
      _
    $region99: #{tpu_custom_call.1} parent=1 // pred_check_branch
      %1433 = sbr.rel (0) target = $region101
    $region100: #{tpu_custom_call.1} parent=1 // pred_region
      %s1435 = ssub.s32 128, 128
      %1436 = vsyncadd [#allocation4], %s1435
      %s1438 = sshll.u32 [#allocation17], 4
      %s1439 = int_to_ptr.vmem [resolvable:$true] %s1438
      %1441 = dma.vmem_to_hbm [thread:$0]  %s1439, 128, %s15, [#allocation4]
    $region101: #{tpu_custom_call.1} parent=1 // pred_fallthru
      _
    // Predicated region
    $region102: #{tpu_custom_call.1} parent=1 // pred_check
      _
    $region103: #{tpu_custom_call.1} parent=1 // pred_check_branch
      %1443 = sbr.rel (0) target = $region105
    $region104: #{tpu_custom_call.1} parent=1 // pred_region
      %1444 = dma.done [#allocation4], 128
    $region105: #{tpu_custom_call.1} parent=1 // pred_fallthru
      _
    %1445 = vsyncpa [#allocation3], 1
    %1446 = vsyncpa [#allocation6], 1
    %1447 = vsyncpa [#allocation9], 1
    %1448 = vsyncpa [#allocation12], 1
    %1449 = vsyncpa [#allocation15], 1
    %1450 = vsyncpa [#allocation4], 1

</llo_original>
